<compile_context>
chip_gen: v7x
topology: tpu7x:2x2x1
jax: 0.10.0
libtpu: 0.0.40
codegen_flags: <defaults>
</compile_context>

<pallas_src>
import math

import jax
import jax.numpy as jnp
from jax.experimental import pallas as pl
from jax.experimental.pallas import tpu as pltpu

# ----------------------------- config --------------------------------------
HIDDEN = 32
HEADS = 4
HEAD_DIM = HIDDEN // HEADS
BATCH = 2
SEQ = 8
ALPHA = 0.1            # config.alpha
ITER_NUM = 2           # config.iter_num
LN_EPS = 1e-5          # config.layer_norm_eps
NEG_BIG = -1e30        # finite stand-in for "edge absent" / cross-batch (exp -> 0)
# config.attention_probs_dropout_prob = config.hidden_dropout_prob = 0.0
# config.diffusion_mode = False


# --------------------------- fused Pallas kernel -----------------------------
def _fused_gn_attn_kernel(x_ref, bias_ref, wqkv_ref, wout_ref, vecs_ref, o_ref):
    # Single invocation; everything stays in VMEM.  N = B*S nodes, D = hidden.
    n, d = x_ref.shape
    x = x_ref[...]            # (N, D)  -- also the residual for the output LayerNorm
    bias = bias_ref[...]      # (N, N)  additive bias in (dst, src) layout:
                              #   0 (valid edge), -10000 (masked edge), NEG_BIG (no edge /
                              #   cross-batch)
    wqkv = wqkv_ref[...]      # (D, 3D) with 1/sqrt(head_dim) pre-folded into q columns
    wout = wout_ref[...]      # (D, D)
    vecs = vecs_ref[...]      # (2, 3D) packed small vectors

    bqkv = vecs[0:1, :]                   # (1, 3D)
    bout = vecs[1:2, 0:d]                 # (1, D)
    gamma = vecs[1:2, d:2 * d]            # (1, D)
    beta = vecs[1:2, 2 * d:3 * d]         # (1, D)

    # Fused QKV projection (q already scaled).
    qkv = jnp.dot(x, wqkv, preferred_element_type=jnp.float32) + bqkv   # (N, 3D)
    q = qkv[:, 0:d]
    k = qkv[:, d:2 * d]
    v = qkv[:, 2 * d:3 * d]

    # keep==True only where the bias is 0 (valid, unmasked edge).  Using the
    # keep/add combination reproduces mask_attention_score's exact "-10000
    # replacement" for masked edges (so fully-masked destinations get a uniform
    # distribution over their incoming edges, like the reference).
    keep = bias > -5000.0                                               # (N, N) bool
    lane = jax.lax.broadcasted_iota(jnp.int32, (n, d), 1)               # (N, D)

    attn_out = jnp.zeros((n, d), jnp.float32)
    for h in range(HEADS):                                              # unrolled (4 heads)
        hm = (lane >= h * HEAD_DIM) & (lane < (h + 1) * HEAD_DIM)       # head lane mask
        qh = jnp.where(hm, q, 0.0)                                      # (N, D), lane-dense
        # score directly in (dst, src) layout: s_t[j, i] = q_j . k_i  (head lanes only,
        # because qh is zero outside them -> contraction over all 32 lanes is equivalent)
        s_t = jax.lax.dot_general(qh, k, (((1,), (1,)), ((), ())),
                                  preferred_element_type=jnp.float32)   # (N, N)
        s_t = jnp.where(keep, s_t, 0.0) + bias

        # edge_softmax over incoming edges (source axis = last axis here)
        m = jnp.max(s_t, axis=-1, keepdims=True)
        p = jnp.exp(s_t - m)
        attn_t = p / jnp.sum(p, axis=-1, keepdims=True)                 # attn_t[j, i]

        # propagation on full-width slabs; vh is zero outside this head's lanes, so
        # hh stays confined to the head's lane slice and the final sum == concat.
        vh = jnp.where(hm, v, 0.0)                                      # (N, D)
        hh = vh
        for _ in range(ITER_NUM):                                       # unrolled (2 iters)
            hh = jnp.dot(attn_t, hh, preferred_element_type=jnp.float32)
            hh = (1.0 - ALPHA) * hh + ALPHA * vh
        attn_out = attn_out + hh

    # gn_self_output: dense + (dropout p=0) + residual + LayerNorm
    o = jnp.dot(attn_out, wout, preferred_element_type=jnp.float32) + bout
    o = o + x
    mean = jnp.mean(o, axis=-1, keepdims=True)
    var = jnp.mean((o - mean) ** 2, axis=-1, keepdims=True)
    o = (o - mean) * jax.lax.rsqrt(var + LN_EPS)
    o_ref[...] = o * gamma + beta


# ------------------------------- wrapper -------------------------------------
def gn_attn_forward(hidden_states, attention_mask, adjacency, params):
    """Forward of gn_attn (graph self-attn + output dense/LayerNorm), one fused kernel."""
    B, S, D = hidden_states.shape
    N = B * S

    # Fold 1/sqrt(head_dim) into the q columns of the QKV projection (trace-time, free).
    scale = jnp.concatenate([
        jnp.full((D,), 1.0 / math.sqrt(HEAD_DIM), jnp.float32),
        jnp.ones((2 * D,), jnp.float32),
    ])
    wqkv = params["wqkv"] * scale[None, :]
    bqkv = params["bqkv"] * scale[None, :]                              # (1, 3D)

    # Block-diagonal additive attention bias in (dst, src) layout:
    #   0        valid edge, both endpoints unmasked
    #   -10000   edge exists but src/dst node mask is False (mask_attention_score)
    #   NEG_BIG  non-edge or cross-batch pair (excluded from the edge softmax)
    node_mask = (attention_mask >= 0).astype(jnp.float32)               # (B, S)
    pair = node_mask[:, :, None] * node_mask[:, None, :]                # (B, S, S), symmetric
    adj_t = adjacency.transpose(0, 2, 1)                                # (B, S, S) [dst, src]
    bias_blocks = jnp.where(adj_t > 0,
                            jnp.where(pair > 0, 0.0, -10000.0),
                            NEG_BIG).astype(jnp.float32)                # (B, S, S)
    bias = jnp.full((N, N), NEG_BIG, jnp.float32)
    for b in range(B):                                                  # trace-time loop
        bias = bias.at[b * S:(b + 1) * S, b * S:(b + 1) * S].set(bias_blocks[b])

    # Pack the small vectors into one input: row 0 = bqkv, row 1 = [bout | gamma | beta].
    vecs = jnp.concatenate([
        bqkv,
        jnp.concatenate([params["bout"], params["gamma"], params["beta"]], axis=1),
    ], axis=0)                                                          # (2, 3D)

    x_flat = hidden_states.reshape(N, D)

    out_flat = pl.pallas_call(
        _fused_gn_attn_kernel,
        out_shape=jax.ShapeDtypeStruct((N, D), jnp.float32),
        in_specs=[
            pl.BlockSpec(memory_space=pltpu.MemorySpace.VMEM),   # x / residual (N, D)
            pl.BlockSpec(memory_space=pltpu.MemorySpace.VMEM),   # attention bias (N, N)
            pl.BlockSpec(memory_space=pltpu.MemorySpace.VMEM),   # wqkv (D, 3D)
            pl.BlockSpec(memory_space=pltpu.MemorySpace.VMEM),   # wout (D, D)
            pl.BlockSpec(memory_space=pltpu.MemorySpace.VMEM),   # packed vectors (2, 3D)
        ],
        out_specs=pl.BlockSpec(memory_space=pltpu.MemorySpace.VMEM),
        compiler_params=pltpu.CompilerParams(vmem_limit_bytes=16 * 1024 * 1024),
    )(x_flat, bias, wqkv, params["wout"], vecs)

    return out_flat.reshape(B, S, D)


# ---------------------------- pure-JAX reference ------------------------------
def reference_forward(hidden_states, attention_mask, adjacency, params):
    B, S, D = hidden_states.shape
    x = hidden_states.reshape(B * S, D)
    qkv = x @ params["wqkv"] + params["bqkv"][0]
    qkv = qkv.reshape(B, S, 3, HEADS, HEAD_DIM)
    q = qkv[:, :, 0] / math.sqrt(HEAD_DIM)
    k = qkv[:, :, 1]
    v = qkv[:, :, 2]
    mask = (attention_mask >= 0).astype(jnp.float32)
    pair = mask[:, :, None] * mask[:, None, :]
    score = jnp.einsum("bihd,bjhd->bijh", k, q)
    score = jnp.where(pair[..., None] > 0, score, -10000.0)
    score = jnp.where(adjacency[..., None] > 0, score, -jnp.inf)
    score = jax.nn.softmax(score, axis=1)          # edge_softmax over incoming edges
    h = v
    for _ in range(ITER_NUM):
        h = jnp.einsum("bijh,bihd->bjhd", score, h)
        h = (1.0 - ALPHA) * h + ALPHA * v
    attn = h.reshape(B * S, D)
    out = attn @ params["wout"] + params["bout"][0]
    out = out + hidden_states.reshape(B * S, D)
    mean = out.mean(-1, keepdims=True)
    var = ((out - mean) ** 2).mean(-1, keepdims=True)
    out = (out - mean) / jnp.sqrt(var + LN_EPS) * params["gamma"][0] + params["beta"][0]
    return out.reshape(B, S, D)


# -------------------------------- main ---------------------------------------
if __name__ == "__main__":
    key = jax.random.PRNGKey(0)
    k_x, k_wqkv, k_bqkv, k_wout, k_bout, k_g, k_b = jax.random.split(key, 7)

    # deterministic parameter init (shapes from the module's __init__)
    params = {
        "wqkv": jax.random.normal(k_wqkv, (HIDDEN, 3 * HIDDEN), jnp.float32) * 0.05,
        "bqkv": jax.random.normal(k_bqkv, (1, 3 * HIDDEN), jnp.float32) * 0.01,
        "wout": jax.random.normal(k_wout, (HIDDEN, HIDDEN), jnp.float32) * 0.05,
        "bout": jax.random.normal(k_bout, (1, HIDDEN), jnp.float32) * 0.01,
        "gamma": 1.0 + jax.random.normal(k_g, (1, HIDDEN), jnp.float32) * 0.02,
        "beta": jax.random.normal(k_b, (1, HIDDEN), jnp.float32) * 0.02,
    }

    hidden_states = jax.random.normal(k_x, (BATCH, SEQ, HIDDEN), jnp.float32)

    # attention_mask: >= 0 means valid; mask out the last two tokens of batch 1
    attention_mask = jnp.zeros((BATCH, SEQ), jnp.float32)
    attention_mask = attention_mask.at[1, SEQ - 2:].set(-1.0)

    # deterministic sparse-ish graph with self loops (edge i -> j within each batch)
    bi = jnp.arange(BATCH)[:, None, None]
    ii = jnp.arange(SEQ)[None, :, None]
    jj = jnp.arange(SEQ)[None, None, :]
    adjacency = (((ii + jj + bi) % 3 != 0) | (ii == jj)).astype(jnp.float32)

    out = gn_attn_forward(hidden_states, attention_mask, adjacency, params)
    out = jax.block_until_ready(out)

    ref = reference_forward(hidden_states, attention_mask, adjacency, params)
    assert out.shape == (BATCH, SEQ, HIDDEN)
    assert jnp.allclose(out, ref, atol=1e-2, rtol=1e-2), "mismatch vs reference"

    print("KERNEL_OK")
</pallas_src>

<mosaic_0001>
module attributes {stable_mosaic.version = 11 : i64} {
  func.func @_fused_gn_attn_kernel(%arg0: memref<16x32xf32, #tpu.memory_space<vmem>>, %arg1: memref<16x16xf32, #tpu.memory_space<vmem>>, %arg2: memref<32x96xf32, #tpu.memory_space<vmem>>, %arg3: memref<32x32xf32, #tpu.memory_space<vmem>>, %arg4: memref<2x96xf32, #tpu.memory_space<vmem>>, %arg5: memref<16x32xf32, #tpu.memory_space<vmem>>) attributes {dimension_semantics = [], scalar_prefetch = 0 : i64, scratch_operands = 0 : i64, tpu.core_type = #tpu.core_type<tc>} {
    %c0 = arith.constant 0 : index
    %c0_0 = arith.constant 0 : index
    %0 = vector.load %arg0[%c0, %c0_0] : memref<16x32xf32, #tpu.memory_space<vmem>>, vector<16x32xf32>
    %c0_1 = arith.constant 0 : index
    %c0_2 = arith.constant 0 : index
    %1 = vector.load %arg1[%c0_1, %c0_2] : memref<16x16xf32, #tpu.memory_space<vmem>>, vector<16x16xf32>
    %c0_3 = arith.constant 0 : index
    %c0_4 = arith.constant 0 : index
    %2 = vector.load %arg2[%c0_3, %c0_4] : memref<32x96xf32, #tpu.memory_space<vmem>>, vector<32x96xf32>
    %c0_5 = arith.constant 0 : index
    %c0_6 = arith.constant 0 : index
    %3 = vector.load %arg3[%c0_5, %c0_6] : memref<32x32xf32, #tpu.memory_space<vmem>>, vector<32x32xf32>
    %c0_7 = arith.constant 0 : index
    %c0_8 = arith.constant 0 : index
    %4 = vector.load %arg4[%c0_7, %c0_8] : memref<2x96xf32, #tpu.memory_space<vmem>>, vector<2x96xf32>
    %5 = vector.extract_strided_slice %4 {offsets = [0, 0], sizes = [1, 96], strides = [1, 1]} : vector<2x96xf32> to vector<1x96xf32>
    %6 = vector.extract_strided_slice %4 {offsets = [1, 0], sizes = [1, 32], strides = [1, 1]} : vector<2x96xf32> to vector<1x32xf32>
    %7 = vector.extract_strided_slice %4 {offsets = [1, 32], sizes = [1, 32], strides = [1, 1]} : vector<2x96xf32> to vector<1x32xf32>
    %8 = vector.extract_strided_slice %4 {offsets = [1, 64], sizes = [1, 32], strides = [1, 1]} : vector<2x96xf32> to vector<1x32xf32>
    %cst = arith.constant dense<0.000000e+00> : vector<16x96xf32>
    %9 = tpu.matmul %0, %2, %cst {dimension_numbers = #tpu.dot_dimension_numbers<[1], [0], [0], [1], [0, 0, 1, 1], [], []>} : vector<16x32xf32>, vector<32x96xf32>, vector<16x96xf32> -> vector<16x96xf32>
    %10 = vector.broadcast %5 : vector<1x96xf32> to vector<16x96xf32>
    %11 = arith.addf %9, %10 : vector<16x96xf32>
    %12 = vector.extract_strided_slice %11 {offsets = [0, 0], sizes = [16, 32], strides = [1, 1]} : vector<16x96xf32> to vector<16x32xf32>
    %13 = vector.extract_strided_slice %11 {offsets = [0, 32], sizes = [16, 32], strides = [1, 1]} : vector<16x96xf32> to vector<16x32xf32>
    %14 = vector.extract_strided_slice %11 {offsets = [0, 64], sizes = [16, 32], strides = [1, 1]} : vector<16x96xf32> to vector<16x32xf32>
    %cst_9 = arith.constant -5.000000e+03 : f32
    %15 = vector.broadcast %cst_9 : f32 to vector<16x16xf32>
    %16 = arith.cmpf ogt, %1, %15 : vector<16x16xf32>
    %17 = tpu.iota {dimensions = array<i32: 1>} : vector<16x32xi32>
    %cst_10 = arith.constant 0.000000e+00 : f32
    %18 = vector.broadcast %cst_10 : f32 to vector<16x32xf32>
    %c0_i32 = arith.constant 0 : i32
    %19 = vector.broadcast %c0_i32 : i32 to vector<16x32xi32>
    %20 = arith.cmpi sge, %17, %19 : vector<16x32xi32>
    %c8_i32 = arith.constant 8 : i32
    %21 = vector.broadcast %c8_i32 : i32 to vector<16x32xi32>
    %22 = arith.cmpi slt, %17, %21 : vector<16x32xi32>
    %23 = arith.andi %20, %22 : vector<16x32xi1>
    %cst_11 = arith.constant 0.000000e+00 : f32
    %24 = vector.broadcast %cst_11 : f32 to vector<16x32xf32>
    %25 = arith.select %23, %12, %24 : vector<16x32xi1>, vector<16x32xf32>
    %cst_12 = arith.constant dense<0.000000e+00> : vector<16x16xf32>
    %26 = tpu.matmul %25, %13, %cst_12 {dimension_numbers = #tpu.dot_dimension_numbers<[1], [1], [0], [0], [0, 0, 1, 0], [], []>} : vector<16x32xf32>, vector<16x32xf32>, vector<16x16xf32> -> vector<16x16xf32>
    %cst_13 = arith.constant 0.000000e+00 : f32
    %27 = vector.broadcast %cst_13 : f32 to vector<16x16xf32>
    %28 = arith.select %16, %26, %27 : vector<16x16xi1>, vector<16x16xf32>
    %29 = arith.addf %28, %1 : vector<16x16xf32>
    %cst_14 = arith.constant dense<0xFF800000> : vector<16xf32>
    %30 = vector.multi_reduction <maximumf>, %29, %cst_14 [1] : vector<16x16xf32> to vector<16xf32>
    %31 = vector.shape_cast %30 : vector<16xf32> to vector<16x1xf32>
    %32 = vector.broadcast %31 : vector<16x1xf32> to vector<16x16xf32>
    %33 = arith.subf %29, %32 : vector<16x16xf32>
    %34 = math.exp %33 : vector<16x16xf32>
    %cst_15 = arith.constant dense<0.000000e+00> : vector<16xf32>
    %35 = vector.multi_reduction <add>, %34, %cst_15 [1] : vector<16x16xf32> to vector<16xf32>
    %36 = vector.shape_cast %35 : vector<16xf32> to vector<16x1xf32>
    %37 = vector.broadcast %36 : vector<16x1xf32> to vector<16x16xf32>
    %38 = arith.divf %34, %37 : vector<16x16xf32>
    %cst_16 = arith.constant 0.000000e+00 : f32
    %39 = vector.broadcast %cst_16 : f32 to vector<16x32xf32>
    %40 = arith.select %23, %14, %39 : vector<16x32xi1>, vector<16x32xf32>
    %cst_17 = arith.constant dense<0.000000e+00> : vector<16x32xf32>
    %41 = tpu.matmul %38, %40, %cst_17 {dimension_numbers = #tpu.dot_dimension_numbers<[1], [0], [0], [1], [0, 0, 1, 1], [], []>} : vector<16x16xf32>, vector<16x32xf32>, vector<16x32xf32> -> vector<16x32xf32>
    %cst_18 = arith.constant 0.899999976 : f32
    %42 = vector.broadcast %cst_18 : f32 to vector<16x32xf32>
    %43 = arith.mulf %42, %41 : vector<16x32xf32>
    %cst_19 = arith.constant 1.000000e-01 : f32
    %44 = vector.broadcast %cst_19 : f32 to vector<16x32xf32>
    %45 = arith.mulf %44, %40 : vector<16x32xf32>
    %46 = arith.addf %43, %45 : vector<16x32xf32>
    %cst_20 = arith.constant dense<0.000000e+00> : vector<16x32xf32>
    %47 = tpu.matmul %38, %46, %cst_20 {dimension_numbers = #tpu.dot_dimension_numbers<[1], [0], [0], [1], [0, 0, 1, 1], [], []>} : vector<16x16xf32>, vector<16x32xf32>, vector<16x32xf32> -> vector<16x32xf32>
    %cst_21 = arith.constant 0.899999976 : f32
    %48 = vector.broadcast %cst_21 : f32 to vector<16x32xf32>
    %49 = arith.mulf %48, %47 : vector<16x32xf32>
    %cst_22 = arith.constant 1.000000e-01 : f32
    %50 = vector.broadcast %cst_22 : f32 to vector<16x32xf32>
    %51 = arith.mulf %50, %40 : vector<16x32xf32>
    %52 = arith.addf %49, %51 : vector<16x32xf32>
    %53 = arith.addf %18, %52 : vector<16x32xf32>
    %c8_i32_23 = arith.constant 8 : i32
    %54 = vector.broadcast %c8_i32_23 : i32 to vector<16x32xi32>
    %55 = arith.cmpi sge, %17, %54 : vector<16x32xi32>
    %c16_i32 = arith.constant 16 : i32
    %56 = vector.broadcast %c16_i32 : i32 to vector<16x32xi32>
    %57 = arith.cmpi slt, %17, %56 : vector<16x32xi32>
    %58 = arith.andi %55, %57 : vector<16x32xi1>
    %cst_24 = arith.constant 0.000000e+00 : f32
    %59 = vector.broadcast %cst_24 : f32 to vector<16x32xf32>
    %60 = arith.select %58, %12, %59 : vector<16x32xi1>, vector<16x32xf32>
    %cst_25 = arith.constant dense<0.000000e+00> : vector<16x16xf32>
    %61 = tpu.matmul %60, %13, %cst_25 {dimension_numbers = #tpu.dot_dimension_numbers<[1], [1], [0], [0], [0, 0, 1, 0], [], []>} : vector<16x32xf32>, vector<16x32xf32>, vector<16x16xf32> -> vector<16x16xf32>
    %cst_26 = arith.constant 0.000000e+00 : f32
    %62 = vector.broadcast %cst_26 : f32 to vector<16x16xf32>
    %63 = arith.select %16, %61, %62 : vector<16x16xi1>, vector<16x16xf32>
    %64 = arith.addf %63, %1 : vector<16x16xf32>
    %cst_27 = arith.constant dense<0xFF800000> : vector<16xf32>
    %65 = vector.multi_reduction <maximumf>, %64, %cst_27 [1] : vector<16x16xf32> to vector<16xf32>
    %66 = vector.shape_cast %65 : vector<16xf32> to vector<16x1xf32>
    %67 = vector.broadcast %66 : vector<16x1xf32> to vector<16x16xf32>
    %68 = arith.subf %64, %67 : vector<16x16xf32>
    %69 = math.exp %68 : vector<16x16xf32>
    %cst_28 = arith.constant dense<0.000000e+00> : vector<16xf32>
    %70 = vector.multi_reduction <add>, %69, %cst_28 [1] : vector<16x16xf32> to vector<16xf32>
    %71 = vector.shape_cast %70 : vector<16xf32> to vector<16x1xf32>
    %72 = vector.broadcast %71 : vector<16x1xf32> to vector<16x16xf32>
    %73 = arith.divf %69, %72 : vector<16x16xf32>
    %cst_29 = arith.constant 0.000000e+00 : f32
    %74 = vector.broadcast %cst_29 : f32 to vector<16x32xf32>
    %75 = arith.select %58, %14, %74 : vector<16x32xi1>, vector<16x32xf32>
    %cst_30 = arith.constant dense<0.000000e+00> : vector<16x32xf32>
    %76 = tpu.matmul %73, %75, %cst_30 {dimension_numbers = #tpu.dot_dimension_numbers<[1], [0], [0], [1], [0, 0, 1, 1], [], []>} : vector<16x16xf32>, vector<16x32xf32>, vector<16x32xf32> -> vector<16x32xf32>
    %cst_31 = arith.constant 0.899999976 : f32
    %77 = vector.broadcast %cst_31 : f32 to vector<16x32xf32>
    %78 = arith.mulf %77, %76 : vector<16x32xf32>
    %cst_32 = arith.constant 1.000000e-01 : f32
    %79 = vector.broadcast %cst_32 : f32 to vector<16x32xf32>
    %80 = arith.mulf %79, %75 : vector<16x32xf32>
    %81 = arith.addf %78, %80 : vector<16x32xf32>
    %cst_33 = arith.constant dense<0.000000e+00> : vector<16x32xf32>
    %82 = tpu.matmul %73, %81, %cst_33 {dimension_numbers = #tpu.dot_dimension_numbers<[1], [0], [0], [1], [0, 0, 1, 1], [], []>} : vector<16x16xf32>, vector<16x32xf32>, vector<16x32xf32> -> vector<16x32xf32>
    %cst_34 = arith.constant 0.899999976 : f32
    %83 = vector.broadcast %cst_34 : f32 to vector<16x32xf32>
    %84 = arith.mulf %83, %82 : vector<16x32xf32>
    %cst_35 = arith.constant 1.000000e-01 : f32
    %85 = vector.broadcast %cst_35 : f32 to vector<16x32xf32>
    %86 = arith.mulf %85, %75 : vector<16x32xf32>
    %87 = arith.addf %84, %86 : vector<16x32xf32>
    %88 = arith.addf %53, %87 : vector<16x32xf32>
    %c16_i32_36 = arith.constant 16 : i32
    %89 = vector.broadcast %c16_i32_36 : i32 to vector<16x32xi32>
    %90 = arith.cmpi sge, %17, %89 : vector<16x32xi32>
    %c24_i32 = arith.constant 24 : i32
    %91 = vector.broadcast %c24_i32 : i32 to vector<16x32xi32>
    %92 = arith.cmpi slt, %17, %91 : vector<16x32xi32>
    %93 = arith.andi %90, %92 : vector<16x32xi1>
    %cst_37 = arith.constant 0.000000e+00 : f32
    %94 = vector.broadcast %cst_37 : f32 to vector<16x32xf32>
    %95 = arith.select %93, %12, %94 : vector<16x32xi1>, vector<16x32xf32>
    %cst_38 = arith.constant dense<0.000000e+00> : vector<16x16xf32>
    %96 = tpu.matmul %95, %13, %cst_38 {dimension_numbers = #tpu.dot_dimension_numbers<[1], [1], [0], [0], [0, 0, 1, 0], [], []>} : vector<16x32xf32>, vector<16x32xf32>, vector<16x16xf32> -> vector<16x16xf32>
    %cst_39 = arith.constant 0.000000e+00 : f32
    %97 = vector.broadcast %cst_39 : f32 to vector<16x16xf32>
    %98 = arith.select %16, %96, %97 : vector<16x16xi1>, vector<16x16xf32>
    %99 = arith.addf %98, %1 : vector<16x16xf32>
    %cst_40 = arith.constant dense<0xFF800000> : vector<16xf32>
    %100 = vector.multi_reduction <maximumf>, %99, %cst_40 [1] : vector<16x16xf32> to vector<16xf32>
    %101 = vector.shape_cast %100 : vector<16xf32> to vector<16x1xf32>
    %102 = vector.broadcast %101 : vector<16x1xf32> to vector<16x16xf32>
    %103 = arith.subf %99, %102 : vector<16x16xf32>
    %104 = math.exp %103 : vector<16x16xf32>
    %cst_41 = arith.constant dense<0.000000e+00> : vector<16xf32>
    %105 = vector.multi_reduction <add>, %104, %cst_41 [1] : vector<16x16xf32> to vector<16xf32>
    %106 = vector.shape_cast %105 : vector<16xf32> to vector<16x1xf32>
    %107 = vector.broadcast %106 : vector<16x1xf32> to vector<16x16xf32>
    %108 = arith.divf %104, %107 : vector<16x16xf32>
    %cst_42 = arith.constant 0.000000e+00 : f32
    %109 = vector.broadcast %cst_42 : f32 to vector<16x32xf32>
    %110 = arith.select %93, %14, %109 : vector<16x32xi1>, vector<16x32xf32>
    %cst_43 = arith.constant dense<0.000000e+00> : vector<16x32xf32>
    %111 = tpu.matmul %108, %110, %cst_43 {dimension_numbers = #tpu.dot_dimension_numbers<[1], [0], [0], [1], [0, 0, 1, 1], [], []>} : vector<16x16xf32>, vector<16x32xf32>, vector<16x32xf32> -> vector<16x32xf32>
    %cst_44 = arith.constant 0.899999976 : f32
    %112 = vector.broadcast %cst_44 : f32 to vector<16x32xf32>
    %113 = arith.mulf %112, %111 : vector<16x32xf32>
    %cst_45 = arith.constant 1.000000e-01 : f32
    %114 = vector.broadcast %cst_45 : f32 to vector<16x32xf32>
    %115 = arith.mulf %114, %110 : vector<16x32xf32>
    %116 = arith.addf %113, %115 : vector<16x32xf32>
    %cst_46 = arith.constant dense<0.000000e+00> : vector<16x32xf32>
    %117 = tpu.matmul %108, %116, %cst_46 {dimension_numbers = #tpu.dot_dimension_numbers<[1], [0], [0], [1], [0, 0, 1, 1], [], []>} : vector<16x16xf32>, vector<16x32xf32>, vector<16x32xf32> -> vector<16x32xf32>
    %cst_47 = arith.constant 0.899999976 : f32
    %118 = vector.broadcast %cst_47 : f32 to vector<16x32xf32>
    %119 = arith.mulf %118, %117 : vector<16x32xf32>
    %cst_48 = arith.constant 1.000000e-01 : f32
    %120 = vector.broadcast %cst_48 : f32 to vector<16x32xf32>
    %121 = arith.mulf %120, %110 : vector<16x32xf32>
    %122 = arith.addf %119, %121 : vector<16x32xf32>
    %123 = arith.addf %88, %122 : vector<16x32xf32>
    %c24_i32_49 = arith.constant 24 : i32
    %124 = vector.broadcast %c24_i32_49 : i32 to vector<16x32xi32>
    %125 = arith.cmpi sge, %17, %124 : vector<16x32xi32>
    %c32_i32 = arith.constant 32 : i32
    %126 = vector.broadcast %c32_i32 : i32 to vector<16x32xi32>
    %127 = arith.cmpi slt, %17, %126 : vector<16x32xi32>
    %128 = arith.andi %125, %127 : vector<16x32xi1>
    %cst_50 = arith.constant 0.000000e+00 : f32
    %129 = vector.broadcast %cst_50 : f32 to vector<16x32xf32>
    %130 = arith.select %128, %12, %129 : vector<16x32xi1>, vector<16x32xf32>
    %cst_51 = arith.constant dense<0.000000e+00> : vector<16x16xf32>
    %131 = tpu.matmul %130, %13, %cst_51 {dimension_numbers = #tpu.dot_dimension_numbers<[1], [1], [0], [0], [0, 0, 1, 0], [], []>} : vector<16x32xf32>, vector<16x32xf32>, vector<16x16xf32> -> vector<16x16xf32>
    %cst_52 = arith.constant 0.000000e+00 : f32
    %132 = vector.broadcast %cst_52 : f32 to vector<16x16xf32>
    %133 = arith.select %16, %131, %132 : vector<16x16xi1>, vector<16x16xf32>
    %134 = arith.addf %133, %1 : vector<16x16xf32>
    %cst_53 = arith.constant dense<0xFF800000> : vector<16xf32>
    %135 = vector.multi_reduction <maximumf>, %134, %cst_53 [1] : vector<16x16xf32> to vector<16xf32>
    %136 = vector.shape_cast %135 : vector<16xf32> to vector<16x1xf32>
    %137 = vector.broadcast %136 : vector<16x1xf32> to vector<16x16xf32>
    %138 = arith.subf %134, %137 : vector<16x16xf32>
    %139 = math.exp %138 : vector<16x16xf32>
    %cst_54 = arith.constant dense<0.000000e+00> : vector<16xf32>
    %140 = vector.multi_reduction <add>, %139, %cst_54 [1] : vector<16x16xf32> to vector<16xf32>
    %141 = vector.shape_cast %140 : vector<16xf32> to vector<16x1xf32>
    %142 = vector.broadcast %141 : vector<16x1xf32> to vector<16x16xf32>
    %143 = arith.divf %139, %142 : vector<16x16xf32>
    %cst_55 = arith.constant 0.000000e+00 : f32
    %144 = vector.broadcast %cst_55 : f32 to vector<16x32xf32>
    %145 = arith.select %128, %14, %144 : vector<16x32xi1>, vector<16x32xf32>
    %cst_56 = arith.constant dense<0.000000e+00> : vector<16x32xf32>
    %146 = tpu.matmul %143, %145, %cst_56 {dimension_numbers = #tpu.dot_dimension_numbers<[1], [0], [0], [1], [0, 0, 1, 1], [], []>} : vector<16x16xf32>, vector<16x32xf32>, vector<16x32xf32> -> vector<16x32xf32>
    %cst_57 = arith.constant 0.899999976 : f32
    %147 = vector.broadcast %cst_57 : f32 to vector<16x32xf32>
    %148 = arith.mulf %147, %146 : vector<16x32xf32>
    %cst_58 = arith.constant 1.000000e-01 : f32
    %149 = vector.broadcast %cst_58 : f32 to vector<16x32xf32>
    %150 = arith.mulf %149, %145 : vector<16x32xf32>
    %151 = arith.addf %148, %150 : vector<16x32xf32>
    %cst_59 = arith.constant dense<0.000000e+00> : vector<16x32xf32>
    %152 = tpu.matmul %143, %151, %cst_59 {dimension_numbers = #tpu.dot_dimension_numbers<[1], [0], [0], [1], [0, 0, 1, 1], [], []>} : vector<16x16xf32>, vector<16x32xf32>, vector<16x32xf32> -> vector<16x32xf32>
    %cst_60 = arith.constant 0.899999976 : f32
    %153 = vector.broadcast %cst_60 : f32 to vector<16x32xf32>
    %154 = arith.mulf %153, %152 : vector<16x32xf32>
    %cst_61 = arith.constant 1.000000e-01 : f32
    %155 = vector.broadcast %cst_61 : f32 to vector<16x32xf32>
    %156 = arith.mulf %155, %145 : vector<16x32xf32>
    %157 = arith.addf %154, %156 : vector<16x32xf32>
    %158 = arith.addf %123, %157 : vector<16x32xf32>
    %cst_62 = arith.constant dense<0.000000e+00> : vector<16x32xf32>
    %159 = tpu.matmul %158, %3, %cst_62 {dimension_numbers = #tpu.dot_dimension_numbers<[1], [0], [0], [1], [0, 0, 1, 1], [], []>} : vector<16x32xf32>, vector<32x32xf32>, vector<16x32xf32> -> vector<16x32xf32>
    %160 = vector.broadcast %6 : vector<1x32xf32> to vector<16x32xf32>
    %161 = arith.addf %159, %160 : vector<16x32xf32>
    %162 = arith.addf %161, %0 : vector<16x32xf32>
    %cst_63 = arith.constant dense<0.000000e+00> : vector<16xf32>
    %163 = vector.multi_reduction <add>, %162, %cst_63 [1] : vector<16x32xf32> to vector<16xf32>
    %164 = vector.shape_cast %163 : vector<16xf32> to vector<16x1xf32>
    %cst_64 = arith.constant 3.200000e+01 : f32
    %165 = vector.broadcast %cst_64 : f32 to vector<16x1xf32>
    %166 = arith.divf %164, %165 : vector<16x1xf32>
    %167 = vector.broadcast %166 : vector<16x1xf32> to vector<16x32xf32>
    %168 = arith.subf %162, %167 : vector<16x32xf32>
    %169 = arith.mulf %168, %168 : vector<16x32xf32>
    %cst_65 = arith.constant dense<0.000000e+00> : vector<16xf32>
    %170 = vector.multi_reduction <add>, %169, %cst_65 [1] : vector<16x32xf32> to vector<16xf32>
    %171 = vector.shape_cast %170 : vector<16xf32> to vector<16x1xf32>
    %cst_66 = arith.constant 3.200000e+01 : f32
    %172 = vector.broadcast %cst_66 : f32 to vector<16x1xf32>
    %173 = arith.divf %171, %172 : vector<16x1xf32>
    %174 = vector.broadcast %166 : vector<16x1xf32> to vector<16x32xf32>
    %175 = arith.subf %162, %174 : vector<16x32xf32>
    %cst_67 = arith.constant 9.99999974E-6 : f32
    %176 = vector.broadcast %cst_67 : f32 to vector<16x1xf32>
    %177 = arith.addf %173, %176 : vector<16x1xf32>
    %178 = math.rsqrt %177 : vector<16x1xf32>
    %179 = vector.broadcast %178 : vector<16x1xf32> to vector<16x32xf32>
    %180 = arith.mulf %175, %179 : vector<16x32xf32>
    %181 = vector.broadcast %7 : vector<1x32xf32> to vector<16x32xf32>
    %182 = arith.mulf %180, %181 : vector<16x32xf32>
    %183 = vector.broadcast %8 : vector<1x32xf32> to vector<16x32xf32>
    %184 = arith.addf %182, %183 : vector<16x32xf32>
    %c0_68 = arith.constant 0 : index
    %c0_69 = arith.constant 0 : index
    %185 = vector.load %arg5[%c0_68, %c0_69] : memref<16x32xf32, #tpu.memory_space<vmem>>, vector<16x32xf32>
    tpu.vector_store %arg5[%c0_68, %c0_69], %184 {strides = array<i32>} : memref<16x32xf32, #tpu.memory_space<vmem>>, vector<16x32xf32>,
    return
  }
}

</mosaic_0001>

<llo_original>
// kernel: tpu_custom_call.1
$region0: #{tpu_custom_call.1}
  #allocation0 [shape = 'u32[]', space=smem, size = 0x4, offset = 0x4, fixed_abs, tag = 'smem constant byte address 0x4 - core index']
  #allocation1 [shape = 'u32[144,128]{1,0:T(1,128)}', space=vmem, size = 0x12000, scoped, tag = 'internal scratch']
  %s0 = inlined_call_operand.hbm [shape: f32[16,32], index: 0, kind: input, shape index: {}]
  %s1 = inlined_call_operand.hbm [shape: f32[16,16], index: 1, kind: input, shape index: {}]
  %s2 = inlined_call_operand.hbm [shape: f32[32,96], index: 2, kind: input, shape index: {}]
  %s3 = inlined_call_operand.hbm [shape: f32[32,32], index: 3, kind: input, shape index: {}]
  %s4 = inlined_call_operand.vmem [shape: f32[2,96], index: 4, kind: input, shape index: {}]
  %s5 = inlined_call_operand.hbm [shape: f32[16,32], index: 5, kind: output, shape index: {}]
  %s6 = sld [smem:[#allocation0]]
  $region46: #{tpu_custom_call.1} parent=0
    _
  %s8 = ssub.s32 1, %s6
  %s9 = scalar_select 0, %s8, %s6
  $region1: #{tpu_custom_call.1} parent=0
    #allocation2 [shape = 'u8[8192]{0}', space=vmem, size = 0x2000, scoped, tag = 'input window, operand 0, single buffered']
    #allocation3 [shape = 's32[1]{0}', space=sflag, size = 0x4, scoped, tag = 'scoped memory for tpu_custom_call.1']
    #allocation4 [shape = 's32[1]{0}', space=sflag, size = 0x4, scoped, tag = 'scoped memory for tpu_custom_call.1']
    #allocation5 [shape = 'u8[8192]{0}', space=vmem, size = 0x2000, scoped, tag = 'input window, operand 1, single buffered']
    #allocation6 [shape = 's32[1]{0}', space=sflag, size = 0x4, scoped, tag = 'scoped memory for tpu_custom_call.1']
    #allocation7 [shape = 'u8[16384]{0}', space=vmem, size = 0x4000, scoped, tag = 'input window, operand 2, single buffered']
    #allocation8 [shape = 'u8[16384]{0}', space=vmem, size = 0x4000, scoped, tag = 'input window, operand 3, single buffered']
    #allocation9 [shape = 's32[1]{0}', space=sflag, size = 0x4, scoped, tag = 'scoped memory for tpu_custom_call.1']
    #allocation10 [shape = 'u8[8192]{0}', space=vmem, size = 0x2000, scoped, tag = 'output window, operand 0, single buffered']
    %10 = vsyncpa [#allocation3], 0
    %11 = vsyncpa [#allocation6], 0
    %12 = vsyncpa [#allocation9], 0
    %13 = vsyncpa [#allocation4], 0
    // Predicated region
    $region2: #{tpu_custom_call.1} parent=1 // pred_check
      _
    $region3: #{tpu_custom_call.1} parent=1 // pred_check_branch
      %15 = sbr.rel (0) target = $region5
    $region4: #{tpu_custom_call.1} parent=1 // pred_region
      %s17 = ssub.s32 256, 256
      %18 = vsyncadd [#allocation3], %s17
      %s19 = sshll.u32 [#allocation2], 4
      %s20 = int_to_ptr.vmem [resolvable:$true] %s19
      %25 = dma.hbm_to_vmem [thread:$0]  %s0, 256, %s20, [#allocation3], 128, 128, 8
    $region5: #{tpu_custom_call.1} parent=1 // pred_fallthru
      _
    // Predicated region
    $region6: #{tpu_custom_call.1} parent=1 // pred_check
      _
    $region7: #{tpu_custom_call.1} parent=1 // pred_check_branch
      %27 = sbr.rel (0) target = $region9
    $region8: #{tpu_custom_call.1} parent=1 // pred_region
      %s29 = ssub.s32 256, 256
      %30 = vsyncadd [#allocation6], %s29
      %s31 = sshll.u32 [#allocation5], 4
      %s32 = int_to_ptr.vmem [resolvable:$true] %s31
      %37 = dma.hbm_to_vmem [thread:$0]  %s1, 256, %s32, [#allocation6], 128, 128, 8
    $region9: #{tpu_custom_call.1} parent=1 // pred_fallthru
      _
    // Predicated region
    $region10: #{tpu_custom_call.1} parent=1 // pred_check
      _
    $region11: #{tpu_custom_call.1} parent=1 // pred_check_branch
      %39 = sbr.rel (0) target = $region13
    $region12: #{tpu_custom_call.1} parent=1 // pred_region
      %s41 = ssub.s32 512, 512
      %42 = vsyncadd [#allocation6], %s41
      %s43 = sshll.u32 [#allocation7], 4
      %s44 = int_to_ptr.vmem [resolvable:$true] %s43
      %49 = dma.hbm_to_vmem [thread:$0]  %s2, 512, %s44, [#allocation6], 128, 128, 8
    $region13: #{tpu_custom_call.1} parent=1 // pred_fallthru
      _
    // Predicated region
    $region14: #{tpu_custom_call.1} parent=1 // pred_check
      _
    $region15: #{tpu_custom_call.1} parent=1 // pred_check_branch
      %51 = sbr.rel (0) target = $region17
    $region16: #{tpu_custom_call.1} parent=1 // pred_region
      %s53 = ssub.s32 512, 512
      %54 = vsyncadd [#allocation9], %s53
      %s55 = sshll.u32 [#allocation8], 4
      %s56 = int_to_ptr.vmem [resolvable:$true] %s55
      %61 = dma.hbm_to_vmem [thread:$0]  %s3, 512, %s56, [#allocation9], 128, 128, 8
    $region17: #{tpu_custom_call.1} parent=1 // pred_fallthru
      _
    // Predicated region
    $region18: #{tpu_custom_call.1} parent=1 // pred_check
      _
    $region19: #{tpu_custom_call.1} parent=1 // pred_check_branch
      %63 = sbr.rel (0) target = $region21
    $region20: #{tpu_custom_call.1} parent=1 // pred_region
      _
    $region21: #{tpu_custom_call.1} parent=1 // pred_fallthru
      _
    // Predicated region
    $region22: #{tpu_custom_call.1} parent=1 // pred_check
      _
    $region23: #{tpu_custom_call.1} parent=1 // pred_check_branch
      %65 = sbr.rel (0) target = $region25
    $region24: #{tpu_custom_call.1} parent=1 // pred_region
      %66 = dma.done [#allocation3], 256
    $region25: #{tpu_custom_call.1} parent=1 // pred_fallthru
      _
    // Predicated region
    $region26: #{tpu_custom_call.1} parent=1 // pred_check
      _
    $region27: #{tpu_custom_call.1} parent=1 // pred_check_branch
      %68 = sbr.rel (0) target = $region29
    $region28: #{tpu_custom_call.1} parent=1 // pred_region
      %69 = dma.done [#allocation6], 256
    $region29: #{tpu_custom_call.1} parent=1 // pred_fallthru
      _
    // Predicated region
    $region30: #{tpu_custom_call.1} parent=1 // pred_check
      _
    $region31: #{tpu_custom_call.1} parent=1 // pred_check_branch
      %71 = sbr.rel (0) target = $region33
    $region32: #{tpu_custom_call.1} parent=1 // pred_region
      %72 = dma.done [#allocation6], 512
    $region33: #{tpu_custom_call.1} parent=1 // pred_fallthru
      _
    // Predicated region
    $region34: #{tpu_custom_call.1} parent=1 // pred_check
      _
    $region35: #{tpu_custom_call.1} parent=1 // pred_check_branch
      %74 = sbr.rel (0) target = $region37
    $region36: #{tpu_custom_call.1} parent=1 // pred_region
      %75 = dma.done [#allocation9], 512
    $region37: #{tpu_custom_call.1} parent=1 // pred_fallthru
      _
    %v76 = vld [vmem:[#allocation2] sm:$0xff]
    %v77 = vld [vmem:[#allocation2 + $0x8] sm:$0xff]
    %v78 = vld [vmem:[#allocation5] sm:$0xff]
    %v79 = vld [vmem:[#allocation5 + $0x8] sm:$0xff]
    %v80 = vld [vmem:[#allocation7] sm:$0xff]
    %v81 = vld [vmem:[#allocation7 + $0x8] sm:$0xff]
    %v82 = vld [vmem:[#allocation7 + $0x10] sm:$0xff]
    %v83 = vld [vmem:[#allocation7 + $0x18] sm:$0xff]
    %v84 = vld [vmem:[#allocation8] sm:$0xff]
    %v85 = vld [vmem:[#allocation8 + $0x8] sm:$0xff]
    %v86 = vld [vmem:[#allocation8 + $0x10] sm:$0xff]
    %v87 = vld [vmem:[#allocation8 + $0x18] sm:$0xff]
    %v88 = vld [vmem:[%s4] sm:$0x3]
    %v89 = vlaneseq
    %v90 = vshrl.u32 %v89, 7
    %v91 = vsub.s32 0, %v90
    %v92 = vrot.slane %v88, %v91
    %vm93 = vcmask 261120
    %v95 = vsel %vm93, %v76, 0
    %v98 = vsel %vm93, %v77, 0
    %100 = vmatprep.subr.mxu0 0.0
    %101 = vmatpush1.msra.mxu0 %v80
    %102 = vmatprep.subr.mxu0 0.0
    %103 = vmatpush1.msra.mxu0 %v81
    %104 = vmatprep.subr.mxu0 0.0
    %105 = vmatpush1.msra.mxu0 %v82
    %106 = vmatprep.subr.mxu0 0.0
    %107 = vmatpush1.msra.mxu0 %v83
    %108 = vmatprep.subr.mxu0 0.0
    %109 = vmatpush1.msra.mxu0 0.0
    %110 = vmatprep.subr.mxu0 0.0
    %111 = vmatpush1.msra.mxu0 0.0
    %112 = vmatprep.subr.mxu0 0.0
    %113 = vmatpush1.msra.mxu0 0.0
    %114 = vmatprep.subr.mxu0 0.0
    %115 = vmatpush1.msra.mxu0 0.0
    %116 = vmatprep.subr.mxu0 0.0
    %117 = vmatpush1.msra.mxu0 0.0
    %118 = vmatprep.subr.mxu0 0.0
    %119 = vmatpush1.msra.mxu0 0.0
    %120 = vmatprep.subr.mxu0 0.0
    %121 = vmatpush1.msra.mxu0 0.0
    %122 = vmatprep.subr.mxu0 0.0
    %123 = vmatpush1.msra.mxu0 0.0
    %124 = vmatprep.subr.mxu0 0.0
    %125 = vmatpush1.msra.mxu0 0.0
    %126 = vmatprep.subr.mxu0 0.0
    %127 = vmatpush1.msra.mxu0 0.0
    %128 = vmatprep.subr.mxu0 0.0
    %129 = vmatpush1.msra.mxu0 0.0
    %130 = vmatprep.subr.mxu0 0.0
    %131 = vmatpush1.msra.mxu0 0.0
    %132 = vmatprep.subr.mxu0 0.0
    %133 = vmatpush1.msra.mxu0 0.0
    %134 = vmatprep.subr.mxu0 0.0
    %135 = vmatpush1.msra.mxu0 0.0
    %136 = vmatprep.subr.mxu0 0.0
    %137 = vmatpush1.msra.mxu0 0.0
    %138 = vmatprep.subr.mxu0 0.0
    %139 = vmatpush1.msra.mxu0 0.0
    %140 = vmatprep.subr.mxu0 0.0
    %141 = vmatpush1.msra.mxu0 0.0
    %142 = vmatprep.subr.mxu0 0.0
    %143 = vmatpush1.msra.mxu0 0.0
    %144 = vmatprep.subr.mxu0 0.0
    %145 = vmatpush1.msra.mxu0 0.0
    %146 = vmatprep.subr.mxu0 0.0
    %147 = vmatpush1.msra.mxu0 0.0
    %148 = vmatprep.subr.mxu0 0.0
    %149 = vmatpush1.msra.mxu0 0.0
    %150 = vmatprep.subr.mxu0 0.0
    %151 = vmatpush1.msra.mxu0 0.0
    %152 = vmatprep.subr.mxu0 0.0
    %153 = vmatpush1.msra.mxu0 0.0
    %154 = vmatprep.subr.mxu0 0.0
    %155 = vmatpush1.msra.mxu0 0.0
    %156 = vmatprep.subr.mxu0 0.0
    %157 = vmatpush1.msra.mxu0 0.0
    %158 = vmatprep.subr.mxu0 0.0
    %159 = vmatpush1.msra.mxu0 0.0
    %160 = vmatprep.subr.mxu0 0.0
    %161 = vmatpush1.msra.mxu0 0.0
    %162 = vmatprep.subr.mxu0 0.0
    %163 = vmatpush1.msra.mxu0 0.0
    %164 = vmatprep.mubr.f32.mxu0 0.0
    %165 = vmatmul.mubr.f32.gmra.mrb[0].mxu0 %v95
    %v166 = vpop.f32.mrb[0].mxu0
    %v167 = vadd.f32 %v92, %v166
    %v168 = vpop.f32.mrb[0].mxu0
    %169 = vmatprep.mubr.f32.mxu0 0.0
    %170 = vmatmul.mubr.f32.gmra.mrb[0].mxu0 %v98
    %v171 = vpop.f32.mrb[0].mxu0
    %v172 = vadd.f32 %v92, %v171
    %v173 = vpop.f32.mrb[0].mxu0
    %174 = vdwg.mxu0
    %vm175 = vcmp.gt.f32.partialorder %v78, -5000.0
    %vm176 = vcmp.gt.f32.partialorder %v79, -5000.0
    %v177 = vlaneseq
    %v178 = vand.u32 %v177, 127
    %vm179 = vcmp.ge.s32.totalorder %v178, 0
    %vm180 = vcmp.lt.s32.totalorder %v178, 8
    %vm181 = vmand %vm179, %vm180
    %v182 = vsel %vm181, %v167, 0.0
    %v183 = vsel %vm181, %v172, 0.0
    %186 = vrot.lane.b32.xlu0 %v167, 96
    %v187 = vpop.permute.xlu0 %186
    %188 = vrot.lane.b32.xlu0 %v172, 96
    %v189 = vpop.permute.xlu0 %188
    %v191 = vsel %vm93, %v182, 0
    %v194 = vsel %vm93, %v183, 0
    %v196 = vsel %vm93, %v187, 0
    %v198 = vsel %vm93, %v189, 0
    %200 = vmatprep.subr.mxu0 0.0
    %201 = vmatpush1.xpose.msra.mxu0 %v196
    %202 = vmatprep.subr.mxu0 0.0
    %203 = vmatpush1.xpose.msra.mxu0 %v198
    %204 = vmatprep.subr.mxu0 0.0
    %205 = vmatpush1.xpose.msra.mxu0 0.0
    %206 = vmatprep.subr.mxu0 0.0
    %207 = vmatpush1.xpose.msra.mxu0 0.0
    %208 = vmatprep.subr.mxu0 0.0
    %209 = vmatpush1.xpose.msra.mxu0 0.0
    %210 = vmatprep.subr.mxu0 0.0
    %211 = vmatpush1.xpose.msra.mxu0 0.0
    %212 = vmatprep.subr.mxu0 0.0
    %213 = vmatpush1.xpose.msra.mxu0 0.0
    %214 = vmatprep.subr.mxu0 0.0
    %215 = vmatpush1.xpose.msra.mxu0 0.0
    %216 = vmatprep.subr.mxu0 0.0
    %217 = vmatpush1.xpose.msra.mxu0 0.0
    %218 = vmatprep.subr.mxu0 0.0
    %219 = vmatpush1.xpose.msra.mxu0 0.0
    %220 = vmatprep.subr.mxu0 0.0
    %221 = vmatpush1.xpose.msra.mxu0 0.0
    %222 = vmatprep.subr.mxu0 0.0
    %223 = vmatpush1.xpose.msra.mxu0 0.0
    %224 = vmatprep.subr.mxu0 0.0
    %225 = vmatpush1.xpose.msra.mxu0 0.0
    %226 = vmatprep.subr.mxu0 0.0
    %227 = vmatpush1.xpose.msra.mxu0 0.0
    %228 = vmatprep.subr.mxu0 0.0
    %229 = vmatpush1.xpose.msra.mxu0 0.0
    %230 = vmatprep.subr.mxu0 0.0
    %231 = vmatpush1.xpose.msra.mxu0 0.0
    %232 = vmatprep.subr.mxu0 0.0
    %233 = vmatpush1.xpose.msra.mxu0 0.0
    %234 = vmatprep.subr.mxu0 0.0
    %235 = vmatpush1.xpose.msra.mxu0 0.0
    %236 = vmatprep.subr.mxu0 0.0
    %237 = vmatpush1.xpose.msra.mxu0 0.0
    %238 = vmatprep.subr.mxu0 0.0
    %239 = vmatpush1.xpose.msra.mxu0 0.0
    %240 = vmatprep.subr.mxu0 0.0
    %241 = vmatpush1.xpose.msra.mxu0 0.0
    %242 = vmatprep.subr.mxu0 0.0
    %243 = vmatpush1.xpose.msra.mxu0 0.0
    %244 = vmatprep.subr.mxu0 0.0
    %245 = vmatpush1.xpose.msra.mxu0 0.0
    %246 = vmatprep.subr.mxu0 0.0
    %247 = vmatpush1.xpose.msra.mxu0 0.0
    %248 = vmatprep.subr.mxu0 0.0
    %249 = vmatpush1.xpose.msra.mxu0 0.0
    %250 = vmatprep.subr.mxu0 0.0
    %251 = vmatpush1.xpose.msra.mxu0 0.0
    %252 = vmatprep.subr.mxu0 0.0
    %253 = vmatpush1.xpose.msra.mxu0 0.0
    %254 = vmatprep.subr.mxu0 0.0
    %255 = vmatpush1.xpose.msra.mxu0 0.0
    %256 = vmatprep.subr.mxu0 0.0
    %257 = vmatpush1.xpose.msra.mxu0 0.0
    %258 = vmatprep.subr.mxu0 0.0
    %259 = vmatpush1.xpose.msra.mxu0 0.0
    %260 = vmatprep.subr.mxu0 0.0
    %261 = vmatpush1.xpose.msra.mxu0 0.0
    %262 = vmatprep.subr.mxu0 0.0
    %263 = vmatpush1.xpose.msra.mxu0 0.0
    %264 = vmatprep.mubr.f32.mxu0 0.0
    %265 = vmatmul.mubr.f32.gmra.mrb[0].mxu0 %v191
    %v266 = vpop.f32.mrb[0].mxu0
    %v267 = vadd.f32 0.0, %v266
    %v268 = vpop.f32.mrb[0].mxu0
    %269 = vmatprep.mubr.f32.mxu0 0.0
    %270 = vmatmul.mubr.f32.gmra.mrb[0].mxu0 %v194
    %v271 = vpop.f32.mrb[0].mxu0
    %v272 = vadd.f32 0.0, %v271
    %v273 = vpop.f32.mrb[0].mxu0
    %274 = vdwg.mxu0
    %v275 = vsel %vm175, %v267, 0.0
    %v276 = vsel %vm176, %v272, 0.0
    %v277 = vadd.f32 %v275, %v78
    %v278 = vadd.f32 %v276, %v79
    %vm279 = vcmask 130048
    %v280 = vsel %vm279, %v277, -inf
    %281 = vmax.xlane.f32.xlu0 %v280
    %v282 = vpop.xlane.xlu0 %281
    %v283 = vsel %vm279, %v278, -inf
    %284 = vmax.xlane.f32.xlu0 %v283
    %v285 = vpop.xlane.xlu0 %284
    %v286 = vsub.f32 %v277, %v282
    %v287 = vsub.f32 %v278, %v285
    %v288 = vmul.f32 %v286, 1.442695
    %v289 = vpow.pop %v288
    %v290 = vmul.f32 %v287, 1.442695
    %v291 = vpow.pop %v290
    %v292 = vsel %vm279, %v289, 0.0
    %293 = vadd.xlane.f32.xlu0 %v292
    %v294 = vpop.xlane.xlu0 %293
    %v295 = vsel %vm279, %v291, 0.0
    %296 = vadd.xlane.f32.xlu0 %v295
    %v297 = vpop.xlane.xlu0 %296
    %v298 = vrcp.pop %v294
    %v299 = vmul.f32 %v289, %v298
    %v300 = vrcp.pop %v297
    %v301 = vmul.f32 %v291, %v300
    %302 = vrot.lane.b32.xlu0 %v167, 64
    %v303 = vpop.permute.xlu0 %302
    %304 = vrot.lane.b32.xlu0 %v172, 64
    %v305 = vpop.permute.xlu0 %304
    %v308 = vsel %vm181, %v303, 0.0
    %v309 = vsel %vm181, %v305, 0.0
    %v311 = vsel %vm279, %v299, 0
    %v314 = vsel %vm279, %v301, 0
    %316 = vmatprep.subr.mxu0 0.0
    %317 = vmatpush1.msra.mxu0 %v308
    %318 = vmatprep.subr.mxu0 0.0
    %319 = vmatpush1.msra.mxu0 %v309
    %320 = vmatprep.subr.mxu0 0.0
    %321 = vmatpush1.msra.mxu0 0.0
    %322 = vmatprep.subr.mxu0 0.0
    %323 = vmatpush1.msra.mxu0 0.0
    %324 = vmatprep.subr.mxu0 0.0
    %325 = vmatpush1.msra.mxu0 0.0
    %326 = vmatprep.subr.mxu0 0.0
    %327 = vmatpush1.msra.mxu0 0.0
    %328 = vmatprep.subr.mxu0 0.0
    %329 = vmatpush1.msra.mxu0 0.0
    %330 = vmatprep.subr.mxu0 0.0
    %331 = vmatpush1.msra.mxu0 0.0
    %332 = vmatprep.subr.mxu0 0.0
    %333 = vmatpush1.msra.mxu0 0.0
    %334 = vmatprep.subr.mxu0 0.0
    %335 = vmatpush1.msra.mxu0 0.0
    %336 = vmatprep.subr.mxu0 0.0
    %337 = vmatpush1.msra.mxu0 0.0
    %338 = vmatprep.subr.mxu0 0.0
    %339 = vmatpush1.msra.mxu0 0.0
    %340 = vmatprep.subr.mxu0 0.0
    %341 = vmatpush1.msra.mxu0 0.0
    %342 = vmatprep.subr.mxu0 0.0
    %343 = vmatpush1.msra.mxu0 0.0
    %344 = vmatprep.subr.mxu0 0.0
    %345 = vmatpush1.msra.mxu0 0.0
    %346 = vmatprep.subr.mxu0 0.0
    %347 = vmatpush1.msra.mxu0 0.0
    %348 = vmatprep.subr.mxu0 0.0
    %349 = vmatpush1.msra.mxu0 0.0
    %350 = vmatprep.subr.mxu0 0.0
    %351 = vmatpush1.msra.mxu0 0.0
    %352 = vmatprep.subr.mxu0 0.0
    %353 = vmatpush1.msra.mxu0 0.0
    %354 = vmatprep.subr.mxu0 0.0
    %355 = vmatpush1.msra.mxu0 0.0
    %356 = vmatprep.subr.mxu0 0.0
    %357 = vmatpush1.msra.mxu0 0.0
    %358 = vmatprep.subr.mxu0 0.0
    %359 = vmatpush1.msra.mxu0 0.0
    %360 = vmatprep.subr.mxu0 0.0
    %361 = vmatpush1.msra.mxu0 0.0
    %362 = vmatprep.subr.mxu0 0.0
    %363 = vmatpush1.msra.mxu0 0.0
    %364 = vmatprep.subr.mxu0 0.0
    %365 = vmatpush1.msra.mxu0 0.0
    %366 = vmatprep.subr.mxu0 0.0
    %367 = vmatpush1.msra.mxu0 0.0
    %368 = vmatprep.subr.mxu0 0.0
    %369 = vmatpush1.msra.mxu0 0.0
    %370 = vmatprep.subr.mxu0 0.0
    %371 = vmatpush1.msra.mxu0 0.0
    %372 = vmatprep.subr.mxu0 0.0
    %373 = vmatpush1.msra.mxu0 0.0
    %374 = vmatprep.subr.mxu0 0.0
    %375 = vmatpush1.msra.mxu0 0.0
    %376 = vmatprep.subr.mxu0 0.0
    %377 = vmatpush1.msra.mxu0 0.0
    %378 = vmatprep.subr.mxu0 0.0
    %379 = vmatpush1.msra.mxu0 0.0
    %380 = vmatprep.mubr.f32.mxu0 0.0
    %381 = vmatmul.mubr.f32.gmra.mrb[0].mxu0 %v311
    %v382 = vpop.f32.mrb[0].mxu0
    %v383 = vadd.f32 0.0, %v382
    %v384 = vpop.f32.mrb[0].mxu0
    %385 = vmatprep.mubr.f32.mxu0 0.0
    %386 = vmatmul.mubr.f32.gmra.mrb[0].mxu0 %v314
    %v387 = vpop.f32.mrb[0].mxu0
    %v388 = vadd.f32 0.0, %v387
    %v389 = vpop.f32.mrb[0].mxu0
    %390 = vdwg.mxu0
    %v391 = vmul.f32 %v383, 0.9
    %v392 = vmul.f32 %v388, 0.9
    %v393 = vmul.f32 %v308, 0.1
    %v394 = vmul.f32 %v309, 0.1
    %v395 = vadd.f32 %v391, %v393
    %v396 = vadd.f32 %v392, %v394
    %397 = vmatprep.subr.mxu0 0.0
    %398 = vmatpush1.msra.mxu0 %v395
    %399 = vmatprep.subr.mxu0 0.0
    %400 = vmatpush1.msra.mxu0 %v396
    %401 = vmatprep.subr.mxu0 0.0
    %402 = vmatpush1.msra.mxu0 0.0
    %403 = vmatprep.subr.mxu0 0.0
    %404 = vmatpush1.msra.mxu0 0.0
    %405 = vmatprep.subr.mxu0 0.0
    %406 = vmatpush1.msra.mxu0 0.0
    %407 = vmatprep.subr.mxu0 0.0
    %408 = vmatpush1.msra.mxu0 0.0
    %409 = vmatprep.subr.mxu0 0.0
    %410 = vmatpush1.msra.mxu0 0.0
    %411 = vmatprep.subr.mxu0 0.0
    %412 = vmatpush1.msra.mxu0 0.0
    %413 = vmatprep.subr.mxu0 0.0
    %414 = vmatpush1.msra.mxu0 0.0
    %415 = vmatprep.subr.mxu0 0.0
    %416 = vmatpush1.msra.mxu0 0.0
    %417 = vmatprep.subr.mxu0 0.0
    %418 = vmatpush1.msra.mxu0 0.0
    %419 = vmatprep.subr.mxu0 0.0
    %420 = vmatpush1.msra.mxu0 0.0
    %421 = vmatprep.subr.mxu0 0.0
    %422 = vmatpush1.msra.mxu0 0.0
    %423 = vmatprep.subr.mxu0 0.0
    %424 = vmatpush1.msra.mxu0 0.0
    %425 = vmatprep.subr.mxu0 0.0
    %426 = vmatpush1.msra.mxu0 0.0
    %427 = vmatprep.subr.mxu0 0.0
    %428 = vmatpush1.msra.mxu0 0.0
    %429 = vmatprep.subr.mxu0 0.0
    %430 = vmatpush1.msra.mxu0 0.0
    %431 = vmatprep.subr.mxu0 0.0
    %432 = vmatpush1.msra.mxu0 0.0
    %433 = vmatprep.subr.mxu0 0.0
    %434 = vmatpush1.msra.mxu0 0.0
    %435 = vmatprep.subr.mxu0 0.0
    %436 = vmatpush1.msra.mxu0 0.0
    %437 = vmatprep.subr.mxu0 0.0
    %438 = vmatpush1.msra.mxu0 0.0
    %439 = vmatprep.subr.mxu0 0.0
    %440 = vmatpush1.msra.mxu0 0.0
    %441 = vmatprep.subr.mxu0 0.0
    %442 = vmatpush1.msra.mxu0 0.0
    %443 = vmatprep.subr.mxu0 0.0
    %444 = vmatpush1.msra.mxu0 0.0
    %445 = vmatprep.subr.mxu0 0.0
    %446 = vmatpush1.msra.mxu0 0.0
    %447 = vmatprep.subr.mxu0 0.0
    %448 = vmatpush1.msra.mxu0 0.0
    %449 = vmatprep.subr.mxu0 0.0
    %450 = vmatpush1.msra.mxu0 0.0
    %451 = vmatprep.subr.mxu0 0.0
    %452 = vmatpush1.msra.mxu0 0.0
    %453 = vmatprep.subr.mxu0 0.0
    %454 = vmatpush1.msra.mxu0 0.0
    %455 = vmatprep.subr.mxu0 0.0
    %456 = vmatpush1.msra.mxu0 0.0
    %457 = vmatprep.subr.mxu0 0.0
    %458 = vmatpush1.msra.mxu0 0.0
    %459 = vmatprep.subr.mxu0 0.0
    %460 = vmatpush1.msra.mxu0 0.0
    %461 = vmatprep.mubr.f32.mxu0 0.0
    %462 = vmatmul.mubr.f32.gmra.mrb[0].mxu0 %v311
    %v463 = vpop.f32.mrb[0].mxu0
    %v464 = vadd.f32 0.0, %v463
    %v465 = vpop.f32.mrb[0].mxu0
    %466 = vmatprep.mubr.f32.mxu0 0.0
    %467 = vmatmul.mubr.f32.gmra.mrb[0].mxu0 %v314
    %v468 = vpop.f32.mrb[0].mxu0
    %v469 = vadd.f32 0.0, %v468
    %v470 = vpop.f32.mrb[0].mxu0
    %471 = vdwg.mxu0
    %v472 = vmul.f32 %v464, 0.9
    %v473 = vmul.f32 %v469, 0.9
    %v474 = vadd.f32 %v472, %v393
    %v475 = vadd.f32 %v473, %v394
    %v476 = vadd.f32 %v474, 0.0
    %v477 = vadd.f32 %v475, 0.0
    %vm478 = vcmp.ge.s32.totalorder %v178, 8
    %vm479 = vcmp.lt.s32.totalorder %v178, 16
    %vm480 = vmand %vm478, %vm479
    %v481 = vsel %vm480, %v167, 0.0
    %v482 = vsel %vm480, %v172, 0.0
    %v484 = vsel %vm93, %v481, 0
    %v487 = vsel %vm93, %v482, 0
    %489 = vmatprep.subr.mxu0 0.0
    %490 = vmatpush1.xpose.msra.mxu0 %v196
    %491 = vmatprep.subr.mxu0 0.0
    %492 = vmatpush1.xpose.msra.mxu0 %v198
    %493 = vmatprep.subr.mxu0 0.0
    %494 = vmatpush1.xpose.msra.mxu0 0.0
    %495 = vmatprep.subr.mxu0 0.0
    %496 = vmatpush1.xpose.msra.mxu0 0.0
    %497 = vmatprep.subr.mxu0 0.0
    %498 = vmatpush1.xpose.msra.mxu0 0.0
    %499 = vmatprep.subr.mxu0 0.0
    %500 = vmatpush1.xpose.msra.mxu0 0.0
    %501 = vmatprep.subr.mxu0 0.0
    %502 = vmatpush1.xpose.msra.mxu0 0.0
    %503 = vmatprep.subr.mxu0 0.0
    %504 = vmatpush1.xpose.msra.mxu0 0.0
    %505 = vmatprep.subr.mxu0 0.0
    %506 = vmatpush1.xpose.msra.mxu0 0.0
    %507 = vmatprep.subr.mxu0 0.0
    %508 = vmatpush1.xpose.msra.mxu0 0.0
    %509 = vmatprep.subr.mxu0 0.0
    %510 = vmatpush1.xpose.msra.mxu0 0.0
    %511 = vmatprep.subr.mxu0 0.0
    %512 = vmatpush1.xpose.msra.mxu0 0.0
    %513 = vmatprep.subr.mxu0 0.0
    %514 = vmatpush1.xpose.msra.mxu0 0.0
    %515 = vmatprep.subr.mxu0 0.0
    %516 = vmatpush1.xpose.msra.mxu0 0.0
    %517 = vmatprep.subr.mxu0 0.0
    %518 = vmatpush1.xpose.msra.mxu0 0.0
    %519 = vmatprep.subr.mxu0 0.0
    %520 = vmatpush1.xpose.msra.mxu0 0.0
    %521 = vmatprep.subr.mxu0 0.0
    %522 = vmatpush1.xpose.msra.mxu0 0.0
    %523 = vmatprep.subr.mxu0 0.0
    %524 = vmatpush1.xpose.msra.mxu0 0.0
    %525 = vmatprep.subr.mxu0 0.0
    %526 = vmatpush1.xpose.msra.mxu0 0.0
    %527 = vmatprep.subr.mxu0 0.0
    %528 = vmatpush1.xpose.msra.mxu0 0.0
    %529 = vmatprep.subr.mxu0 0.0
    %530 = vmatpush1.xpose.msra.mxu0 0.0
    %531 = vmatprep.subr.mxu0 0.0
    %532 = vmatpush1.xpose.msra.mxu0 0.0
    %533 = vmatprep.subr.mxu0 0.0
    %534 = vmatpush1.xpose.msra.mxu0 0.0
    %535 = vmatprep.subr.mxu0 0.0
    %536 = vmatpush1.xpose.msra.mxu0 0.0
    %537 = vmatprep.subr.mxu0 0.0
    %538 = vmatpush1.xpose.msra.mxu0 0.0
    %539 = vmatprep.subr.mxu0 0.0
    %540 = vmatpush1.xpose.msra.mxu0 0.0
    %541 = vmatprep.subr.mxu0 0.0
    %542 = vmatpush1.xpose.msra.mxu0 0.0
    %543 = vmatprep.subr.mxu0 0.0
    %544 = vmatpush1.xpose.msra.mxu0 0.0
    %545 = vmatprep.subr.mxu0 0.0
    %546 = vmatpush1.xpose.msra.mxu0 0.0
    %547 = vmatprep.subr.mxu0 0.0
    %548 = vmatpush1.xpose.msra.mxu0 0.0
    %549 = vmatprep.subr.mxu0 0.0
    %550 = vmatpush1.xpose.msra.mxu0 0.0
    %551 = vmatprep.subr.mxu0 0.0
    %552 = vmatpush1.xpose.msra.mxu0 0.0
    %553 = vmatprep.mubr.f32.mxu0 0.0
    %554 = vmatmul.mubr.f32.gmra.mrb[0].mxu0 %v484
    %v555 = vpop.f32.mrb[0].mxu0
    %v556 = vadd.f32 0.0, %v555
    %v557 = vpop.f32.mrb[0].mxu0
    %558 = vmatprep.mubr.f32.mxu0 0.0
    %559 = vmatmul.mubr.f32.gmra.mrb[0].mxu0 %v487
    %v560 = vpop.f32.mrb[0].mxu0
    %v561 = vadd.f32 0.0, %v560
    %v562 = vpop.f32.mrb[0].mxu0
    %563 = vdwg.mxu0
    %v564 = vsel %vm175, %v556, 0.0
    %v565 = vsel %vm176, %v561, 0.0
    %v566 = vadd.f32 %v564, %v78
    %v567 = vadd.f32 %v565, %v79
    %v568 = vsel %vm279, %v566, -inf
    %569 = vmax.xlane.f32.xlu0 %v568
    %v570 = vpop.xlane.xlu0 %569
    %v571 = vsel %vm279, %v567, -inf
    %572 = vmax.xlane.f32.xlu0 %v571
    %v573 = vpop.xlane.xlu0 %572
    %v574 = vsub.f32 %v566, %v570
    %v575 = vsub.f32 %v567, %v573
    %v576 = vmul.f32 %v574, 1.442695
    %v577 = vpow.pop %v576
    %v578 = vmul.f32 %v575, 1.442695
    %v579 = vpow.pop %v578
    %v580 = vsel %vm279, %v577, 0.0
    %581 = vadd.xlane.f32.xlu0 %v580
    %v582 = vpop.xlane.xlu0 %581
    %v583 = vsel %vm279, %v579, 0.0
    %584 = vadd.xlane.f32.xlu0 %v583
    %v585 = vpop.xlane.xlu0 %584
    %v586 = vrcp.pop %v582
    %v587 = vmul.f32 %v577, %v586
    %v588 = vrcp.pop %v585
    %v589 = vmul.f32 %v579, %v588
    %v590 = vsel %vm480, %v303, 0.0
    %v591 = vsel %vm480, %v305, 0.0
    %v593 = vsel %vm279, %v587, 0
    %v596 = vsel %vm279, %v589, 0
    %598 = vmatprep.subr.mxu0 0.0
    %599 = vmatpush1.msra.mxu0 %v590
    %600 = vmatprep.subr.mxu0 0.0
    %601 = vmatpush1.msra.mxu0 %v591
    %602 = vmatprep.subr.mxu0 0.0
    %603 = vmatpush1.msra.mxu0 0.0
    %604 = vmatprep.subr.mxu0 0.0
    %605 = vmatpush1.msra.mxu0 0.0
    %606 = vmatprep.subr.mxu0 0.0
    %607 = vmatpush1.msra.mxu0 0.0
    %608 = vmatprep.subr.mxu0 0.0
    %609 = vmatpush1.msra.mxu0 0.0
    %610 = vmatprep.subr.mxu0 0.0
    %611 = vmatpush1.msra.mxu0 0.0
    %612 = vmatprep.subr.mxu0 0.0
    %613 = vmatpush1.msra.mxu0 0.0
    %614 = vmatprep.subr.mxu0 0.0
    %615 = vmatpush1.msra.mxu0 0.0
    %616 = vmatprep.subr.mxu0 0.0
    %617 = vmatpush1.msra.mxu0 0.0
    %618 = vmatprep.subr.mxu0 0.0
    %619 = vmatpush1.msra.mxu0 0.0
    %620 = vmatprep.subr.mxu0 0.0
    %621 = vmatpush1.msra.mxu0 0.0
    %622 = vmatprep.subr.mxu0 0.0
    %623 = vmatpush1.msra.mxu0 0.0
    %624 = vmatprep.subr.mxu0 0.0
    %625 = vmatpush1.msra.mxu0 0.0
    %626 = vmatprep.subr.mxu0 0.0
    %627 = vmatpush1.msra.mxu0 0.0
    %628 = vmatprep.subr.mxu0 0.0
    %629 = vmatpush1.msra.mxu0 0.0
    %630 = vmatprep.subr.mxu0 0.0
    %631 = vmatpush1.msra.mxu0 0.0
    %632 = vmatprep.subr.mxu0 0.0
    %633 = vmatpush1.msra.mxu0 0.0
    %634 = vmatprep.subr.mxu0 0.0
    %635 = vmatpush1.msra.mxu0 0.0
    %636 = vmatprep.subr.mxu0 0.0
    %637 = vmatpush1.msra.mxu0 0.0
    %638 = vmatprep.subr.mxu0 0.0
    %639 = vmatpush1.msra.mxu0 0.0
    %640 = vmatprep.subr.mxu0 0.0
    %641 = vmatpush1.msra.mxu0 0.0
    %642 = vmatprep.subr.mxu0 0.0
    %643 = vmatpush1.msra.mxu0 0.0
    %644 = vmatprep.subr.mxu0 0.0
    %645 = vmatpush1.msra.mxu0 0.0
    %646 = vmatprep.subr.mxu0 0.0
    %647 = vmatpush1.msra.mxu0 0.0
    %648 = vmatprep.subr.mxu0 0.0
    %649 = vmatpush1.msra.mxu0 0.0
    %650 = vmatprep.subr.mxu0 0.0
    %651 = vmatpush1.msra.mxu0 0.0
    %652 = vmatprep.subr.mxu0 0.0
    %653 = vmatpush1.msra.mxu0 0.0
    %654 = vmatprep.subr.mxu0 0.0
    %655 = vmatpush1.msra.mxu0 0.0
    %656 = vmatprep.subr.mxu0 0.0
    %657 = vmatpush1.msra.mxu0 0.0
    %658 = vmatprep.subr.mxu0 0.0
    %659 = vmatpush1.msra.mxu0 0.0
    %660 = vmatprep.subr.mxu0 0.0
    %661 = vmatpush1.msra.mxu0 0.0
    %662 = vmatprep.mubr.f32.mxu0 0.0
    %663 = vmatmul.mubr.f32.gmra.mrb[0].mxu0 %v593
    %v664 = vpop.f32.mrb[0].mxu0
    %v665 = vadd.f32 0.0, %v664
    %v666 = vpop.f32.mrb[0].mxu0
    %667 = vmatprep.mubr.f32.mxu0 0.0
    %668 = vmatmul.mubr.f32.gmra.mrb[0].mxu0 %v596
    %v669 = vpop.f32.mrb[0].mxu0
    %v670 = vadd.f32 0.0, %v669
    %v671 = vpop.f32.mrb[0].mxu0
    %672 = vdwg.mxu0
    %v673 = vmul.f32 %v665, 0.9
    %v674 = vmul.f32 %v670, 0.9
    %v675 = vmul.f32 %v590, 0.1
    %v676 = vmul.f32 %v591, 0.1
    %v677 = vadd.f32 %v673, %v675
    %v678 = vadd.f32 %v674, %v676
    %679 = vmatprep.subr.mxu0 0.0
    %680 = vmatpush1.msra.mxu0 %v677
    %681 = vmatprep.subr.mxu0 0.0
    %682 = vmatpush1.msra.mxu0 %v678
    %683 = vmatprep.subr.mxu0 0.0
    %684 = vmatpush1.msra.mxu0 0.0
    %685 = vmatprep.subr.mxu0 0.0
    %686 = vmatpush1.msra.mxu0 0.0
    %687 = vmatprep.subr.mxu0 0.0
    %688 = vmatpush1.msra.mxu0 0.0
    %689 = vmatprep.subr.mxu0 0.0
    %690 = vmatpush1.msra.mxu0 0.0
    %691 = vmatprep.subr.mxu0 0.0
    %692 = vmatpush1.msra.mxu0 0.0
    %693 = vmatprep.subr.mxu0 0.0
    %694 = vmatpush1.msra.mxu0 0.0
    %695 = vmatprep.subr.mxu0 0.0
    %696 = vmatpush1.msra.mxu0 0.0
    %697 = vmatprep.subr.mxu0 0.0
    %698 = vmatpush1.msra.mxu0 0.0
    %699 = vmatprep.subr.mxu0 0.0
    %700 = vmatpush1.msra.mxu0 0.0
    %701 = vmatprep.subr.mxu0 0.0
    %702 = vmatpush1.msra.mxu0 0.0
    %703 = vmatprep.subr.mxu0 0.0
    %704 = vmatpush1.msra.mxu0 0.0
    %705 = vmatprep.subr.mxu0 0.0
    %706 = vmatpush1.msra.mxu0 0.0
    %707 = vmatprep.subr.mxu0 0.0
    %708 = vmatpush1.msra.mxu0 0.0
    %709 = vmatprep.subr.mxu0 0.0
    %710 = vmatpush1.msra.mxu0 0.0
    %711 = vmatprep.subr.mxu0 0.0
    %712 = vmatpush1.msra.mxu0 0.0
    %713 = vmatprep.subr.mxu0 0.0
    %714 = vmatpush1.msra.mxu0 0.0
    %715 = vmatprep.subr.mxu0 0.0
    %716 = vmatpush1.msra.mxu0 0.0
    %717 = vmatprep.subr.mxu0 0.0
    %718 = vmatpush1.msra.mxu0 0.0
    %719 = vmatprep.subr.mxu0 0.0
    %720 = vmatpush1.msra.mxu0 0.0
    %721 = vmatprep.subr.mxu0 0.0
    %722 = vmatpush1.msra.mxu0 0.0
    %723 = vmatprep.subr.mxu0 0.0
    %724 = vmatpush1.msra.mxu0 0.0
    %725 = vmatprep.subr.mxu0 0.0
    %726 = vmatpush1.msra.mxu0 0.0
    %727 = vmatprep.subr.mxu0 0.0
    %728 = vmatpush1.msra.mxu0 0.0
    %729 = vmatprep.subr.mxu0 0.0
    %730 = vmatpush1.msra.mxu0 0.0
    %731 = vmatprep.subr.mxu0 0.0
    %732 = vmatpush1.msra.mxu0 0.0
    %733 = vmatprep.subr.mxu0 0.0
    %734 = vmatpush1.msra.mxu0 0.0
    %735 = vmatprep.subr.mxu0 0.0
    %736 = vmatpush1.msra.mxu0 0.0
    %737 = vmatprep.subr.mxu0 0.0
    %738 = vmatpush1.msra.mxu0 0.0
    %739 = vmatprep.subr.mxu0 0.0
    %740 = vmatpush1.msra.mxu0 0.0
    %741 = vmatprep.subr.mxu0 0.0
    %742 = vmatpush1.msra.mxu0 0.0
    %743 = vmatprep.mubr.f32.mxu0 0.0
    %744 = vmatmul.mubr.f32.gmra.mrb[0].mxu0 %v593
    %v745 = vpop.f32.mrb[0].mxu0
    %v746 = vadd.f32 0.0, %v745
    %v747 = vpop.f32.mrb[0].mxu0
    %748 = vmatprep.mubr.f32.mxu0 0.0
    %749 = vmatmul.mubr.f32.gmra.mrb[0].mxu0 %v596
    %v750 = vpop.f32.mrb[0].mxu0
    %v751 = vadd.f32 0.0, %v750
    %v752 = vpop.f32.mrb[0].mxu0
    %753 = vdwg.mxu0
    %v754 = vmul.f32 %v746, 0.9
    %v755 = vmul.f32 %v751, 0.9
    %v756 = vadd.f32 %v754, %v675
    %v757 = vadd.f32 %v755, %v676
    %v758 = vadd.f32 %v476, %v756
    %v759 = vadd.f32 %v477, %v757
    %vm760 = vcmp.ge.s32.totalorder %v178, 16
    %vm761 = vcmp.lt.s32.totalorder %v178, 24
    %vm762 = vmand %vm760, %vm761
    %v763 = vsel %vm762, %v167, 0.0
    %v764 = vsel %vm762, %v172, 0.0
    %v766 = vsel %vm93, %v763, 0
    %v769 = vsel %vm93, %v764, 0
    %771 = vmatprep.subr.mxu0 0.0
    %772 = vmatpush1.xpose.msra.mxu0 %v196
    %773 = vmatprep.subr.mxu0 0.0
    %774 = vmatpush1.xpose.msra.mxu0 %v198
    %775 = vmatprep.subr.mxu0 0.0
    %776 = vmatpush1.xpose.msra.mxu0 0.0
    %777 = vmatprep.subr.mxu0 0.0
    %778 = vmatpush1.xpose.msra.mxu0 0.0
    %779 = vmatprep.subr.mxu0 0.0
    %780 = vmatpush1.xpose.msra.mxu0 0.0
    %781 = vmatprep.subr.mxu0 0.0
    %782 = vmatpush1.xpose.msra.mxu0 0.0
    %783 = vmatprep.subr.mxu0 0.0
    %784 = vmatpush1.xpose.msra.mxu0 0.0
    %785 = vmatprep.subr.mxu0 0.0
    %786 = vmatpush1.xpose.msra.mxu0 0.0
    %787 = vmatprep.subr.mxu0 0.0
    %788 = vmatpush1.xpose.msra.mxu0 0.0
    %789 = vmatprep.subr.mxu0 0.0
    %790 = vmatpush1.xpose.msra.mxu0 0.0
    %791 = vmatprep.subr.mxu0 0.0
    %792 = vmatpush1.xpose.msra.mxu0 0.0
    %793 = vmatprep.subr.mxu0 0.0
    %794 = vmatpush1.xpose.msra.mxu0 0.0
    %795 = vmatprep.subr.mxu0 0.0
    %796 = vmatpush1.xpose.msra.mxu0 0.0
    %797 = vmatprep.subr.mxu0 0.0
    %798 = vmatpush1.xpose.msra.mxu0 0.0
    %799 = vmatprep.subr.mxu0 0.0
    %800 = vmatpush1.xpose.msra.mxu0 0.0
    %801 = vmatprep.subr.mxu0 0.0
    %802 = vmatpush1.xpose.msra.mxu0 0.0
    %803 = vmatprep.subr.mxu0 0.0
    %804 = vmatpush1.xpose.msra.mxu0 0.0
    %805 = vmatprep.subr.mxu0 0.0
    %806 = vmatpush1.xpose.msra.mxu0 0.0
    %807 = vmatprep.subr.mxu0 0.0
    %808 = vmatpush1.xpose.msra.mxu0 0.0
    %809 = vmatprep.subr.mxu0 0.0
    %810 = vmatpush1.xpose.msra.mxu0 0.0
    %811 = vmatprep.subr.mxu0 0.0
    %812 = vmatpush1.xpose.msra.mxu0 0.0
    %813 = vmatprep.subr.mxu0 0.0
    %814 = vmatpush1.xpose.msra.mxu0 0.0
    %815 = vmatprep.subr.mxu0 0.0
    %816 = vmatpush1.xpose.msra.mxu0 0.0
    %817 = vmatprep.subr.mxu0 0.0
    %818 = vmatpush1.xpose.msra.mxu0 0.0
    %819 = vmatprep.subr.mxu0 0.0
    %820 = vmatpush1.xpose.msra.mxu0 0.0
    %821 = vmatprep.subr.mxu0 0.0
    %822 = vmatpush1.xpose.msra.mxu0 0.0
    %823 = vmatprep.subr.mxu0 0.0
    %824 = vmatpush1.xpose.msra.mxu0 0.0
    %825 = vmatprep.subr.mxu0 0.0
    %826 = vmatpush1.xpose.msra.mxu0 0.0
    %827 = vmatprep.subr.mxu0 0.0
    %828 = vmatpush1.xpose.msra.mxu0 0.0
    %829 = vmatprep.subr.mxu0 0.0
    %830 = vmatpush1.xpose.msra.mxu0 0.0
    %831 = vmatprep.subr.mxu0 0.0
    %832 = vmatpush1.xpose.msra.mxu0 0.0
    %833 = vmatprep.subr.mxu0 0.0
    %834 = vmatpush1.xpose.msra.mxu0 0.0
    %835 = vmatprep.mubr.f32.mxu0 0.0
    %836 = vmatmul.mubr.f32.gmra.mrb[0].mxu0 %v766
    %v837 = vpop.f32.mrb[0].mxu0
    %v838 = vadd.f32 0.0, %v837
    %v839 = vpop.f32.mrb[0].mxu0
    %840 = vmatprep.mubr.f32.mxu0 0.0
    %841 = vmatmul.mubr.f32.gmra.mrb[0].mxu0 %v769
    %v842 = vpop.f32.mrb[0].mxu0
    %v843 = vadd.f32 0.0, %v842
    %v844 = vpop.f32.mrb[0].mxu0
    %845 = vdwg.mxu0
    %v846 = vsel %vm175, %v838, 0.0
    %v847 = vsel %vm176, %v843, 0.0
    %v848 = vadd.f32 %v846, %v78
    %v849 = vadd.f32 %v847, %v79
    %v850 = vsel %vm279, %v848, -inf
    %851 = vmax.xlane.f32.xlu0 %v850
    %v852 = vpop.xlane.xlu0 %851
    %v853 = vsel %vm279, %v849, -inf
    %854 = vmax.xlane.f32.xlu0 %v853
    %v855 = vpop.xlane.xlu0 %854
    %v856 = vsub.f32 %v848, %v852
    %v857 = vsub.f32 %v849, %v855
    %v858 = vmul.f32 %v856, 1.442695
    %v859 = vpow.pop %v858
    %v860 = vmul.f32 %v857, 1.442695
    %v861 = vpow.pop %v860
    %v862 = vsel %vm279, %v859, 0.0
    %863 = vadd.xlane.f32.xlu0 %v862
    %v864 = vpop.xlane.xlu0 %863
    %v865 = vsel %vm279, %v861, 0.0
    %866 = vadd.xlane.f32.xlu0 %v865
    %v867 = vpop.xlane.xlu0 %866
    %v868 = vrcp.pop %v864
    %v869 = vmul.f32 %v859, %v868
    %v870 = vrcp.pop %v867
    %v871 = vmul.f32 %v861, %v870
    %v872 = vsel %vm762, %v303, 0.0
    %v873 = vsel %vm762, %v305, 0.0
    %v875 = vsel %vm279, %v869, 0
    %v878 = vsel %vm279, %v871, 0
    %880 = vmatprep.subr.mxu0 0.0
    %881 = vmatpush1.msra.mxu0 %v872
    %882 = vmatprep.subr.mxu0 0.0
    %883 = vmatpush1.msra.mxu0 %v873
    %884 = vmatprep.subr.mxu0 0.0
    %885 = vmatpush1.msra.mxu0 0.0
    %886 = vmatprep.subr.mxu0 0.0
    %887 = vmatpush1.msra.mxu0 0.0
    %888 = vmatprep.subr.mxu0 0.0
    %889 = vmatpush1.msra.mxu0 0.0
    %890 = vmatprep.subr.mxu0 0.0
    %891 = vmatpush1.msra.mxu0 0.0
    %892 = vmatprep.subr.mxu0 0.0
    %893 = vmatpush1.msra.mxu0 0.0
    %894 = vmatprep.subr.mxu0 0.0
    %895 = vmatpush1.msra.mxu0 0.0
    %896 = vmatprep.subr.mxu0 0.0
    %897 = vmatpush1.msra.mxu0 0.0
    %898 = vmatprep.subr.mxu0 0.0
    %899 = vmatpush1.msra.mxu0 0.0
    %900 = vmatprep.subr.mxu0 0.0
    %901 = vmatpush1.msra.mxu0 0.0
    %902 = vmatprep.subr.mxu0 0.0
    %903 = vmatpush1.msra.mxu0 0.0
    %904 = vmatprep.subr.mxu0 0.0
    %905 = vmatpush1.msra.mxu0 0.0
    %906 = vmatprep.subr.mxu0 0.0
    %907 = vmatpush1.msra.mxu0 0.0
    %908 = vmatprep.subr.mxu0 0.0
    %909 = vmatpush1.msra.mxu0 0.0
    %910 = vmatprep.subr.mxu0 0.0
    %911 = vmatpush1.msra.mxu0 0.0
    %912 = vmatprep.subr.mxu0 0.0
    %913 = vmatpush1.msra.mxu0 0.0
    %914 = vmatprep.subr.mxu0 0.0
    %915 = vmatpush1.msra.mxu0 0.0
    %916 = vmatprep.subr.mxu0 0.0
    %917 = vmatpush1.msra.mxu0 0.0
    %918 = vmatprep.subr.mxu0 0.0
    %919 = vmatpush1.msra.mxu0 0.0
    %920 = vmatprep.subr.mxu0 0.0
    %921 = vmatpush1.msra.mxu0 0.0
    %922 = vmatprep.subr.mxu0 0.0
    %923 = vmatpush1.msra.mxu0 0.0
    %924 = vmatprep.subr.mxu0 0.0
    %925 = vmatpush1.msra.mxu0 0.0
    %926 = vmatprep.subr.mxu0 0.0
    %927 = vmatpush1.msra.mxu0 0.0
    %928 = vmatprep.subr.mxu0 0.0
    %929 = vmatpush1.msra.mxu0 0.0
    %930 = vmatprep.subr.mxu0 0.0
    %931 = vmatpush1.msra.mxu0 0.0
    %932 = vmatprep.subr.mxu0 0.0
    %933 = vmatpush1.msra.mxu0 0.0
    %934 = vmatprep.subr.mxu0 0.0
    %935 = vmatpush1.msra.mxu0 0.0
    %936 = vmatprep.subr.mxu0 0.0
    %937 = vmatpush1.msra.mxu0 0.0
    %938 = vmatprep.subr.mxu0 0.0
    %939 = vmatpush1.msra.mxu0 0.0
    %940 = vmatprep.subr.mxu0 0.0
    %941 = vmatpush1.msra.mxu0 0.0
    %942 = vmatprep.subr.mxu0 0.0
    %943 = vmatpush1.msra.mxu0 0.0
    %944 = vmatprep.mubr.f32.mxu0 0.0
    %945 = vmatmul.mubr.f32.gmra.mrb[0].mxu0 %v875
    %v946 = vpop.f32.mrb[0].mxu0
    %v947 = vadd.f32 0.0, %v946
    %v948 = vpop.f32.mrb[0].mxu0
    %949 = vmatprep.mubr.f32.mxu0 0.0
    %950 = vmatmul.mubr.f32.gmra.mrb[0].mxu0 %v878
    %v951 = vpop.f32.mrb[0].mxu0
    %v952 = vadd.f32 0.0, %v951
    %v953 = vpop.f32.mrb[0].mxu0
    %954 = vdwg.mxu0
    %v955 = vmul.f32 %v947, 0.9
    %v956 = vmul.f32 %v952, 0.9
    %v957 = vmul.f32 %v872, 0.1
    %v958 = vmul.f32 %v873, 0.1
    %v959 = vadd.f32 %v955, %v957
    %v960 = vadd.f32 %v956, %v958
    %961 = vmatprep.subr.mxu0 0.0
    %962 = vmatpush1.msra.mxu0 %v959
    %963 = vmatprep.subr.mxu0 0.0
    %964 = vmatpush1.msra.mxu0 %v960
    %965 = vmatprep.subr.mxu0 0.0
    %966 = vmatpush1.msra.mxu0 0.0
    %967 = vmatprep.subr.mxu0 0.0
    %968 = vmatpush1.msra.mxu0 0.0
    %969 = vmatprep.subr.mxu0 0.0
    %970 = vmatpush1.msra.mxu0 0.0
    %971 = vmatprep.subr.mxu0 0.0
    %972 = vmatpush1.msra.mxu0 0.0
    %973 = vmatprep.subr.mxu0 0.0
    %974 = vmatpush1.msra.mxu0 0.0
    %975 = vmatprep.subr.mxu0 0.0
    %976 = vmatpush1.msra.mxu0 0.0
    %977 = vmatprep.subr.mxu0 0.0
    %978 = vmatpush1.msra.mxu0 0.0
    %979 = vmatprep.subr.mxu0 0.0
    %980 = vmatpush1.msra.mxu0 0.0
    %981 = vmatprep.subr.mxu0 0.0
    %982 = vmatpush1.msra.mxu0 0.0
    %983 = vmatprep.subr.mxu0 0.0
    %984 = vmatpush1.msra.mxu0 0.0
    %985 = vmatprep.subr.mxu0 0.0
    %986 = vmatpush1.msra.mxu0 0.0
    %987 = vmatprep.subr.mxu0 0.0
    %988 = vmatpush1.msra.mxu0 0.0
    %989 = vmatprep.subr.mxu0 0.0
    %990 = vmatpush1.msra.mxu0 0.0
    %991 = vmatprep.subr.mxu0 0.0
    %992 = vmatpush1.msra.mxu0 0.0
    %993 = vmatprep.subr.mxu0 0.0
    %994 = vmatpush1.msra.mxu0 0.0
    %995 = vmatprep.subr.mxu0 0.0
    %996 = vmatpush1.msra.mxu0 0.0
    %997 = vmatprep.subr.mxu0 0.0
    %998 = vmatpush1.msra.mxu0 0.0
    %999 = vmatprep.subr.mxu0 0.0
    %1000 = vmatpush1.msra.mxu0 0.0
    %1001 = vmatprep.subr.mxu0 0.0
    %1002 = vmatpush1.msra.mxu0 0.0
    %1003 = vmatprep.subr.mxu0 0.0
    %1004 = vmatpush1.msra.mxu0 0.0
    %1005 = vmatprep.subr.mxu0 0.0
    %1006 = vmatpush1.msra.mxu0 0.0
    %1007 = vmatprep.subr.mxu0 0.0
    %1008 = vmatpush1.msra.mxu0 0.0
    %1009 = vmatprep.subr.mxu0 0.0
    %1010 = vmatpush1.msra.mxu0 0.0
    %1011 = vmatprep.subr.mxu0 0.0
    %1012 = vmatpush1.msra.mxu0 0.0
    %1013 = vmatprep.subr.mxu0 0.0
    %1014 = vmatpush1.msra.mxu0 0.0
    %1015 = vmatprep.subr.mxu0 0.0
    %1016 = vmatpush1.msra.mxu0 0.0
    %1017 = vmatprep.subr.mxu0 0.0
    %1018 = vmatpush1.msra.mxu0 0.0
    %1019 = vmatprep.subr.mxu0 0.0
    %1020 = vmatpush1.msra.mxu0 0.0
    %1021 = vmatprep.subr.mxu0 0.0
    %1022 = vmatpush1.msra.mxu0 0.0
    %1023 = vmatprep.subr.mxu0 0.0
    %1024 = vmatpush1.msra.mxu0 0.0
    %1025 = vmatprep.mubr.f32.mxu0 0.0
    %1026 = vmatmul.mubr.f32.gmra.mrb[0].mxu0 %v875
    %v1027 = vpop.f32.mrb[0].mxu0
    %v1028 = vadd.f32 0.0, %v1027
    %v1029 = vpop.f32.mrb[0].mxu0
    %1030 = vmatprep.mubr.f32.mxu0 0.0
    %1031 = vmatmul.mubr.f32.gmra.mrb[0].mxu0 %v878
    %v1032 = vpop.f32.mrb[0].mxu0
    %v1033 = vadd.f32 0.0, %v1032
    %v1034 = vpop.f32.mrb[0].mxu0
    %1035 = vdwg.mxu0
    %v1036 = vmul.f32 %v1028, 0.9
    %v1037 = vmul.f32 %v1033, 0.9
    %v1038 = vadd.f32 %v1036, %v957
    %v1039 = vadd.f32 %v1037, %v958
    %v1040 = vadd.f32 %v758, %v1038
    %v1041 = vadd.f32 %v759, %v1039
    %vm1042 = vcmp.ge.s32.totalorder %v178, 24
    %vm1043 = vcmp.lt.s32.totalorder %v178, 32
    %vm1044 = vmand %vm1042, %vm1043
    %v1045 = vsel %vm1044, %v167, 0.0
    %v1046 = vsel %vm1044, %v172, 0.0
    %v1048 = vsel %vm93, %v1045, 0
    %v1051 = vsel %vm93, %v1046, 0
    %1053 = vmatprep.subr.mxu0 0.0
    %1054 = vmatpush1.xpose.msra.mxu0 %v196
    %1055 = vmatprep.subr.mxu0 0.0
    %1056 = vmatpush1.xpose.msra.mxu0 %v198
    %1057 = vmatprep.subr.mxu0 0.0
    %1058 = vmatpush1.xpose.msra.mxu0 0.0
    %1059 = vmatprep.subr.mxu0 0.0
    %1060 = vmatpush1.xpose.msra.mxu0 0.0
    %1061 = vmatprep.subr.mxu0 0.0
    %1062 = vmatpush1.xpose.msra.mxu0 0.0
    %1063 = vmatprep.subr.mxu0 0.0
    %1064 = vmatpush1.xpose.msra.mxu0 0.0
    %1065 = vmatprep.subr.mxu0 0.0
    %1066 = vmatpush1.xpose.msra.mxu0 0.0
    %1067 = vmatprep.subr.mxu0 0.0
    %1068 = vmatpush1.xpose.msra.mxu0 0.0
    %1069 = vmatprep.subr.mxu0 0.0
    %1070 = vmatpush1.xpose.msra.mxu0 0.0
    %1071 = vmatprep.subr.mxu0 0.0
    %1072 = vmatpush1.xpose.msra.mxu0 0.0
    %1073 = vmatprep.subr.mxu0 0.0
    %1074 = vmatpush1.xpose.msra.mxu0 0.0
    %1075 = vmatprep.subr.mxu0 0.0
    %1076 = vmatpush1.xpose.msra.mxu0 0.0
    %1077 = vmatprep.subr.mxu0 0.0
    %1078 = vmatpush1.xpose.msra.mxu0 0.0
    %1079 = vmatprep.subr.mxu0 0.0
    %1080 = vmatpush1.xpose.msra.mxu0 0.0
    %1081 = vmatprep.subr.mxu0 0.0
    %1082 = vmatpush1.xpose.msra.mxu0 0.0
    %1083 = vmatprep.subr.mxu0 0.0
    %1084 = vmatpush1.xpose.msra.mxu0 0.0
    %1085 = vmatprep.subr.mxu0 0.0
    %1086 = vmatpush1.xpose.msra.mxu0 0.0
    %1087 = vmatprep.subr.mxu0 0.0
    %1088 = vmatpush1.xpose.msra.mxu0 0.0
    %1089 = vmatprep.subr.mxu0 0.0
    %1090 = vmatpush1.xpose.msra.mxu0 0.0
    %1091 = vmatprep.subr.mxu0 0.0
    %1092 = vmatpush1.xpose.msra.mxu0 0.0
    %1093 = vmatprep.subr.mxu0 0.0
    %1094 = vmatpush1.xpose.msra.mxu0 0.0
    %1095 = vmatprep.subr.mxu0 0.0
    %1096 = vmatpush1.xpose.msra.mxu0 0.0
    %1097 = vmatprep.subr.mxu0 0.0
    %1098 = vmatpush1.xpose.msra.mxu0 0.0
    %1099 = vmatprep.subr.mxu0 0.0
    %1100 = vmatpush1.xpose.msra.mxu0 0.0
    %1101 = vmatprep.subr.mxu0 0.0
    %1102 = vmatpush1.xpose.msra.mxu0 0.0
    %1103 = vmatprep.subr.mxu0 0.0
    %1104 = vmatpush1.xpose.msra.mxu0 0.0
    %1105 = vmatprep.subr.mxu0 0.0
    %1106 = vmatpush1.xpose.msra.mxu0 0.0
    %1107 = vmatprep.subr.mxu0 0.0
    %1108 = vmatpush1.xpose.msra.mxu0 0.0
    %1109 = vmatprep.subr.mxu0 0.0
    %1110 = vmatpush1.xpose.msra.mxu0 0.0
    %1111 = vmatprep.subr.mxu0 0.0
    %1112 = vmatpush1.xpose.msra.mxu0 0.0
    %1113 = vmatprep.subr.mxu0 0.0
    %1114 = vmatpush1.xpose.msra.mxu0 0.0
    %1115 = vmatprep.subr.mxu0 0.0
    %1116 = vmatpush1.xpose.msra.mxu0 0.0
    %1117 = vmatprep.mubr.f32.mxu0 0.0
    %1118 = vmatmul.mubr.f32.gmra.mrb[0].mxu0 %v1048
    %v1119 = vpop.f32.mrb[0].mxu0
    %v1120 = vadd.f32 0.0, %v1119
    %v1121 = vpop.f32.mrb[0].mxu0
    %1122 = vmatprep.mubr.f32.mxu0 0.0
    %1123 = vmatmul.mubr.f32.gmra.mrb[0].mxu0 %v1051
    %v1124 = vpop.f32.mrb[0].mxu0
    %v1125 = vadd.f32 0.0, %v1124
    %v1126 = vpop.f32.mrb[0].mxu0
    %1127 = vdwg.mxu0
    %v1128 = vsel %vm175, %v1120, 0.0
    %v1129 = vsel %vm176, %v1125, 0.0
    %v1130 = vadd.f32 %v1128, %v78
    %v1131 = vadd.f32 %v1129, %v79
    %v1132 = vsel %vm279, %v1130, -inf
    %1133 = vmax.xlane.f32.xlu0 %v1132
    %v1134 = vpop.xlane.xlu0 %1133
    %v1135 = vsel %vm279, %v1131, -inf
    %1136 = vmax.xlane.f32.xlu0 %v1135
    %v1137 = vpop.xlane.xlu0 %1136
    %v1138 = vsub.f32 %v1130, %v1134
    %v1139 = vsub.f32 %v1131, %v1137
    %v1140 = vmul.f32 %v1138, 1.442695
    %v1141 = vpow.pop %v1140
    %v1142 = vmul.f32 %v1139, 1.442695
    %v1143 = vpow.pop %v1142
    %v1144 = vsel %vm279, %v1141, 0.0
    %1145 = vadd.xlane.f32.xlu0 %v1144
    %v1146 = vpop.xlane.xlu0 %1145
    %v1147 = vsel %vm279, %v1143, 0.0
    %1148 = vadd.xlane.f32.xlu0 %v1147
    %v1149 = vpop.xlane.xlu0 %1148
    %v1150 = vrcp.pop %v1146
    %v1151 = vmul.f32 %v1141, %v1150
    %v1152 = vrcp.pop %v1149
    %v1153 = vmul.f32 %v1143, %v1152
    %v1154 = vsel %vm1044, %v303, 0.0
    %v1155 = vsel %vm1044, %v305, 0.0
    %v1157 = vsel %vm279, %v1151, 0
    %v1160 = vsel %vm279, %v1153, 0
    %1162 = vmatprep.subr.mxu0 0.0
    %1163 = vmatpush1.msra.mxu0 %v1154
    %1164 = vmatprep.subr.mxu0 0.0
    %1165 = vmatpush1.msra.mxu0 %v1155
    %1166 = vmatprep.subr.mxu0 0.0
    %1167 = vmatpush1.msra.mxu0 0.0
    %1168 = vmatprep.subr.mxu0 0.0
    %1169 = vmatpush1.msra.mxu0 0.0
    %1170 = vmatprep.subr.mxu0 0.0
    %1171 = vmatpush1.msra.mxu0 0.0
    %1172 = vmatprep.subr.mxu0 0.0
    %1173 = vmatpush1.msra.mxu0 0.0
    %1174 = vmatprep.subr.mxu0 0.0
    %1175 = vmatpush1.msra.mxu0 0.0
    %1176 = vmatprep.subr.mxu0 0.0
    %1177 = vmatpush1.msra.mxu0 0.0
    %1178 = vmatprep.subr.mxu0 0.0
    %1179 = vmatpush1.msra.mxu0 0.0
    %1180 = vmatprep.subr.mxu0 0.0
    %1181 = vmatpush1.msra.mxu0 0.0
    %1182 = vmatprep.subr.mxu0 0.0
    %1183 = vmatpush1.msra.mxu0 0.0
    %1184 = vmatprep.subr.mxu0 0.0
    %1185 = vmatpush1.msra.mxu0 0.0
    %1186 = vmatprep.subr.mxu0 0.0
    %1187 = vmatpush1.msra.mxu0 0.0
    %1188 = vmatprep.subr.mxu0 0.0
    %1189 = vmatpush1.msra.mxu0 0.0
    %1190 = vmatprep.subr.mxu0 0.0
    %1191 = vmatpush1.msra.mxu0 0.0
    %1192 = vmatprep.subr.mxu0 0.0
    %1193 = vmatpush1.msra.mxu0 0.0
    %1194 = vmatprep.subr.mxu0 0.0
    %1195 = vmatpush1.msra.mxu0 0.0
    %1196 = vmatprep.subr.mxu0 0.0
    %1197 = vmatpush1.msra.mxu0 0.0
    %1198 = vmatprep.subr.mxu0 0.0
    %1199 = vmatpush1.msra.mxu0 0.0
    %1200 = vmatprep.subr.mxu0 0.0
    %1201 = vmatpush1.msra.mxu0 0.0
    %1202 = vmatprep.subr.mxu0 0.0
    %1203 = vmatpush1.msra.mxu0 0.0
    %1204 = vmatprep.subr.mxu0 0.0
    %1205 = vmatpush1.msra.mxu0 0.0
    %1206 = vmatprep.subr.mxu0 0.0
    %1207 = vmatpush1.msra.mxu0 0.0
    %1208 = vmatprep.subr.mxu0 0.0
    %1209 = vmatpush1.msra.mxu0 0.0
    %1210 = vmatprep.subr.mxu0 0.0
    %1211 = vmatpush1.msra.mxu0 0.0
    %1212 = vmatprep.subr.mxu0 0.0
    %1213 = vmatpush1.msra.mxu0 0.0
    %1214 = vmatprep.subr.mxu0 0.0
    %1215 = vmatpush1.msra.mxu0 0.0
    %1216 = vmatprep.subr.mxu0 0.0
    %1217 = vmatpush1.msra.mxu0 0.0
    %1218 = vmatprep.subr.mxu0 0.0
    %1219 = vmatpush1.msra.mxu0 0.0
    %1220 = vmatprep.subr.mxu0 0.0
    %1221 = vmatpush1.msra.mxu0 0.0
    %1222 = vmatprep.subr.mxu0 0.0
    %1223 = vmatpush1.msra.mxu0 0.0
    %1224 = vmatprep.subr.mxu0 0.0
    %1225 = vmatpush1.msra.mxu0 0.0
    %1226 = vmatprep.mubr.f32.mxu0 0.0
    %1227 = vmatmul.mubr.f32.gmra.mrb[0].mxu0 %v1157
    %v1228 = vpop.f32.mrb[0].mxu0
    %v1229 = vadd.f32 0.0, %v1228
    %v1230 = vpop.f32.mrb[0].mxu0
    %1231 = vmatprep.mubr.f32.mxu0 0.0
    %1232 = vmatmul.mubr.f32.gmra.mrb[0].mxu0 %v1160
    %v1233 = vpop.f32.mrb[0].mxu0
    %v1234 = vadd.f32 0.0, %v1233
    %v1235 = vpop.f32.mrb[0].mxu0
    %1236 = vdwg.mxu0
    %v1237 = vmul.f32 %v1229, 0.9
    %v1238 = vmul.f32 %v1234, 0.9
    %v1239 = vmul.f32 %v1154, 0.1
    %v1240 = vmul.f32 %v1155, 0.1
    %v1241 = vadd.f32 %v1237, %v1239
    %v1242 = vadd.f32 %v1238, %v1240
    %1243 = vmatprep.subr.mxu0 0.0
    %1244 = vmatpush1.msra.mxu0 %v1241
    %1245 = vmatprep.subr.mxu0 0.0
    %1246 = vmatpush1.msra.mxu0 %v1242
    %1247 = vmatprep.subr.mxu0 0.0
    %1248 = vmatpush1.msra.mxu0 0.0
    %1249 = vmatprep.subr.mxu0 0.0
    %1250 = vmatpush1.msra.mxu0 0.0
    %1251 = vmatprep.subr.mxu0 0.0
    %1252 = vmatpush1.msra.mxu0 0.0
    %1253 = vmatprep.subr.mxu0 0.0
    %1254 = vmatpush1.msra.mxu0 0.0
    %1255 = vmatprep.subr.mxu0 0.0
    %1256 = vmatpush1.msra.mxu0 0.0
    %1257 = vmatprep.subr.mxu0 0.0
    %1258 = vmatpush1.msra.mxu0 0.0
    %1259 = vmatprep.subr.mxu0 0.0
    %1260 = vmatpush1.msra.mxu0 0.0
    %1261 = vmatprep.subr.mxu0 0.0
    %1262 = vmatpush1.msra.mxu0 0.0
    %1263 = vmatprep.subr.mxu0 0.0
    %1264 = vmatpush1.msra.mxu0 0.0
    %1265 = vmatprep.subr.mxu0 0.0
    %1266 = vmatpush1.msra.mxu0 0.0
    %1267 = vmatprep.subr.mxu0 0.0
    %1268 = vmatpush1.msra.mxu0 0.0
    %1269 = vmatprep.subr.mxu0 0.0
    %1270 = vmatpush1.msra.mxu0 0.0
    %1271 = vmatprep.subr.mxu0 0.0
    %1272 = vmatpush1.msra.mxu0 0.0
    %1273 = vmatprep.subr.mxu0 0.0
    %1274 = vmatpush1.msra.mxu0 0.0
    %1275 = vmatprep.subr.mxu0 0.0
    %1276 = vmatpush1.msra.mxu0 0.0
    %1277 = vmatprep.subr.mxu0 0.0
    %1278 = vmatpush1.msra.mxu0 0.0
    %1279 = vmatprep.subr.mxu0 0.0
    %1280 = vmatpush1.msra.mxu0 0.0
    %1281 = vmatprep.subr.mxu0 0.0
    %1282 = vmatpush1.msra.mxu0 0.0
    %1283 = vmatprep.subr.mxu0 0.0
    %1284 = vmatpush1.msra.mxu0 0.0
    %1285 = vmatprep.subr.mxu0 0.0
    %1286 = vmatpush1.msra.mxu0 0.0
    %1287 = vmatprep.subr.mxu0 0.0
    %1288 = vmatpush1.msra.mxu0 0.0
    %1289 = vmatprep.subr.mxu0 0.0
    %1290 = vmatpush1.msra.mxu0 0.0
    %1291 = vmatprep.subr.mxu0 0.0
    %1292 = vmatpush1.msra.mxu0 0.0
    %1293 = vmatprep.subr.mxu0 0.0
    %1294 = vmatpush1.msra.mxu0 0.0
    %1295 = vmatprep.subr.mxu0 0.0
    %1296 = vmatpush1.msra.mxu0 0.0
    %1297 = vmatprep.subr.mxu0 0.0
    %1298 = vmatpush1.msra.mxu0 0.0
    %1299 = vmatprep.subr.mxu0 0.0
    %1300 = vmatpush1.msra.mxu0 0.0
    %1301 = vmatprep.subr.mxu0 0.0
    %1302 = vmatpush1.msra.mxu0 0.0
    %1303 = vmatprep.subr.mxu0 0.0
    %1304 = vmatpush1.msra.mxu0 0.0
    %1305 = vmatprep.subr.mxu0 0.0
    %1306 = vmatpush1.msra.mxu0 0.0
    %1307 = vmatprep.mubr.f32.mxu0 0.0
    %1308 = vmatmul.mubr.f32.gmra.mrb[0].mxu0 %v1157
    %v1309 = vpop.f32.mrb[0].mxu0
    %v1310 = vadd.f32 0.0, %v1309
    %v1311 = vpop.f32.mrb[0].mxu0
    %1312 = vmatprep.mubr.f32.mxu0 0.0
    %1313 = vmatmul.mubr.f32.gmra.mrb[0].mxu0 %v1160
    %v1314 = vpop.f32.mrb[0].mxu0
    %v1315 = vadd.f32 0.0, %v1314
    %v1316 = vpop.f32.mrb[0].mxu0
    %1317 = vdwg.mxu0
    %v1318 = vmul.f32 %v1310, 0.9
    %v1319 = vmul.f32 %v1315, 0.9
    %v1320 = vadd.f32 %v1318, %v1239
    %v1321 = vadd.f32 %v1319, %v1240
    %v1322 = vadd.f32 %v1040, %v1320
    %v1323 = vadd.f32 %v1041, %v1321
    %v1324 = vlaneseq
    %v1325 = vshrl.u32 %v1324, 7
    %v1326 = vsub.s32 1, %v1325
    %v1327 = vrot.slane %v88, %v1326
    %v1329 = vsel %vm93, %v1322, 0
    %v1332 = vsel %vm93, %v1323, 0
    %1334 = vmatprep.subr.mxu0 0.0
    %1335 = vmatpush1.msra.mxu0 %v84
    %1336 = vmatprep.subr.mxu0 0.0
    %1337 = vmatpush1.msra.mxu0 %v85
    %1338 = vmatprep.subr.mxu0 0.0
    %1339 = vmatpush1.msra.mxu0 %v86
    %1340 = vmatprep.subr.mxu0 0.0
    %1341 = vmatpush1.msra.mxu0 %v87
    %1342 = vmatprep.subr.mxu0 0.0
    %1343 = vmatpush1.msra.mxu0 0.0
    %1344 = vmatprep.subr.mxu0 0.0
    %1345 = vmatpush1.msra.mxu0 0.0
    %1346 = vmatprep.subr.mxu0 0.0
    %1347 = vmatpush1.msra.mxu0 0.0
    %1348 = vmatprep.subr.mxu0 0.0
    %1349 = vmatpush1.msra.mxu0 0.0
    %1350 = vmatprep.subr.mxu0 0.0
    %1351 = vmatpush1.msra.mxu0 0.0
    %1352 = vmatprep.subr.mxu0 0.0
    %1353 = vmatpush1.msra.mxu0 0.0
    %1354 = vmatprep.subr.mxu0 0.0
    %1355 = vmatpush1.msra.mxu0 0.0
    %1356 = vmatprep.subr.mxu0 0.0
    %1357 = vmatpush1.msra.mxu0 0.0
    %1358 = vmatprep.subr.mxu0 0.0
    %1359 = vmatpush1.msra.mxu0 0.0
    %1360 = vmatprep.subr.mxu0 0.0
    %1361 = vmatpush1.msra.mxu0 0.0
    %1362 = vmatprep.subr.mxu0 0.0
    %1363 = vmatpush1.msra.mxu0 0.0
    %1364 = vmatprep.subr.mxu0 0.0
    %1365 = vmatpush1.msra.mxu0 0.0
    %1366 = vmatprep.subr.mxu0 0.0
    %1367 = vmatpush1.msra.mxu0 0.0
    %1368 = vmatprep.subr.mxu0 0.0
    %1369 = vmatpush1.msra.mxu0 0.0
    %1370 = vmatprep.subr.mxu0 0.0
    %1371 = vmatpush1.msra.mxu0 0.0
    %1372 = vmatprep.subr.mxu0 0.0
    %1373 = vmatpush1.msra.mxu0 0.0
    %1374 = vmatprep.subr.mxu0 0.0
    %1375 = vmatpush1.msra.mxu0 0.0
    %1376 = vmatprep.subr.mxu0 0.0
    %1377 = vmatpush1.msra.mxu0 0.0
    %1378 = vmatprep.subr.mxu0 0.0
    %1379 = vmatpush1.msra.mxu0 0.0
    %1380 = vmatprep.subr.mxu0 0.0
    %1381 = vmatpush1.msra.mxu0 0.0
    %1382 = vmatprep.subr.mxu0 0.0
    %1383 = vmatpush1.msra.mxu0 0.0
    %1384 = vmatprep.subr.mxu0 0.0
    %1385 = vmatpush1.msra.mxu0 0.0
    %1386 = vmatprep.subr.mxu0 0.0
    %1387 = vmatpush1.msra.mxu0 0.0
    %1388 = vmatprep.subr.mxu0 0.0
    %1389 = vmatpush1.msra.mxu0 0.0
    %1390 = vmatprep.subr.mxu0 0.0
    %1391 = vmatpush1.msra.mxu0 0.0
    %1392 = vmatprep.subr.mxu0 0.0
    %1393 = vmatpush1.msra.mxu0 0.0
    %1394 = vmatprep.subr.mxu0 0.0
    %1395 = vmatpush1.msra.mxu0 0.0
    %1396 = vmatprep.subr.mxu0 0.0
    %1397 = vmatpush1.msra.mxu0 0.0
    %1398 = vmatprep.mubr.f32.mxu0 0.0
    %1399 = vmatmul.mubr.f32.gmra.mrb[0].mxu0 %v1329
    %v1400 = vpop.f32.mrb[0].mxu0
    %v1401 = vadd.f32 %v1327, %v1400
    %v1402 = vpop.f32.mrb[0].mxu0
    %1403 = vmatprep.mubr.f32.mxu0 0.0
    %1404 = vmatmul.mubr.f32.gmra.mrb[0].mxu0 %v1332
    %v1405 = vpop.f32.mrb[0].mxu0
    %v1406 = vadd.f32 %v1327, %v1405
    %v1407 = vpop.f32.mrb[0].mxu0
    %1408 = vdwg.mxu0
    %v1409 = vadd.f32 %v1401, %v76
    %v1410 = vadd.f32 %v1406, %v77
    %v1411 = vsel %vm93, %v1409, 0.0
    %1412 = vadd.xlane.f32.xlu0 %v1411
    %v1413 = vpop.xlane.xlu0 %1412
    %v1414 = vsel %vm93, %v1410, 0.0
    %1415 = vadd.xlane.f32.xlu0 %v1414
    %v1416 = vpop.xlane.xlu0 %1415
    %v1417 = vrcp.pop 32.0
    %v1418 = vmul.f32 %v1413, %v1417
    %v1419 = vmul.f32 %v1416, %v1417
    %v1420 = vsub.f32 %v1409, %v1418
    %v1421 = vsub.f32 %v1410, %v1419
    %v1422 = vmul.f32 %v1420, %v1420
    %v1423 = vmul.f32 %v1421, %v1421
    %v1424 = vsel %vm93, %v1422, 0.0
    %1425 = vadd.xlane.f32.xlu0 %v1424
    %v1426 = vpop.xlane.xlu0 %1425
    %v1427 = vsel %vm93, %v1423, 0.0
    %1428 = vadd.xlane.f32.xlu0 %v1427
    %v1429 = vpop.xlane.xlu0 %1428
    %v1430 = vmul.f32 %v1426, %v1417
    %v1431 = vmul.f32 %v1429, %v1417
    %v1432 = vadd.f32 %v1430, 1e-05
    %v1433 = vadd.f32 %v1431, 1e-05
    %v1434 = vrsqrt.pop %v1432
    %v1435 = vrsqrt.pop %v1433
    %v1436 = vmul.f32 %v1420, %v1434
    %v1437 = vmul.f32 %v1421, %v1435
    %1439 = vrot.lane.b32.xlu0 %v1327, 96
    %v1440 = vpop.permute.xlu0 %1439
    %v1442 = vmul.f32 %v1436, %v1440
    %v1443 = vmul.f32 %v1437, %v1440
    %1444 = vrot.lane.b32.xlu0 %v1327, 64
    %v1445 = vpop.permute.xlu0 %1444
    %v1447 = vadd.f32 %v1442, %v1445
    %v1448 = vadd.f32 %v1443, %v1445
    %1449 = vst.msk [vmem:[#allocation10] sm:$0xff] %vm93, %v1447
    %1450 = vst.msk [vmem:[#allocation10 + $0x8] sm:$0xff] %vm93, %v1448
    // Predicated region
    $region38: #{tpu_custom_call.1} parent=1 // pred_check
      _
    $region39: #{tpu_custom_call.1} parent=1 // pred_check_branch
      %1452 = sbr.rel (0) target = $region41
    $region40: #{tpu_custom_call.1} parent=1 // pred_region
      %s1454 = ssub.s32 256, 256
      %1455 = vsyncadd [#allocation4], %s1454
      %s1456 = sshll.u32 [#allocation10], 4
      %s1457 = int_to_ptr.vmem [resolvable:$true] %s1456
      %1462 = dma.vmem_to_hbm [thread:$0]  %s1457, 256, %s5, [#allocation4], 128, 128, 8
    $region41: #{tpu_custom_call.1} parent=1 // pred_fallthru
      _
    // Predicated region
    $region42: #{tpu_custom_call.1} parent=1 // pred_check
      _
    $region43: #{tpu_custom_call.1} parent=1 // pred_check_branch
      %1464 = sbr.rel (0) target = $region45
    $region44: #{tpu_custom_call.1} parent=1 // pred_region
      %1465 = dma.done [#allocation4], 256
    $region45: #{tpu_custom_call.1} parent=1 // pred_fallthru
      _
    %1466 = vsyncpa [#allocation3], 1
    %1467 = vsyncpa [#allocation6], 1
    %1468 = vsyncpa [#allocation9], 1
    %1469 = vsyncpa [#allocation4], 1

</llo_original>
